<compile_context>
chip_gen: v7x
topology: tpu7x:2x2x1
jax: 0.10.0
libtpu: 0.0.40
codegen_flags: <defaults>
</compile_context>

<pallas_src>
import jax
import jax.numpy as jnp
from jax.experimental import pallas as pl
from jax.experimental.pallas import tpu as pltpu


# ----------------------------------------------------------------------------- helpers
def _multi_tensorcore_chip() -> bool:
    """True on TPU chips with >1 TensorCore per chip (v4/v5p megacore, v7x).

    On those chips we keep a parallel per-batch grid axis so the batch is
    sharded across cores; on single-TC v5e/v6e a per-batch grid step is pure
    sequential-loop overhead (~0.35 us/step, larger than the compute here), so
    we collapse the batch into a single kernel body instead."""
    try:
        kind = jax.devices()[0].device_kind.lower()
    except Exception:
        return False
    return any(tag in kind for tag in ("v4", "v5p", "v7", "7x"))


# ----------------------------------------------------------------------------- kernel
def _cuts_plus_kernel(x_ref, gT_ref, wuc_ref, buc_ref, h0_ref,
                      we1_ref, be1_ref, we2a_ref, we2b_ref, be2_ref,
                      wde_ref, wdh_ref, bd_ref, out_ref):
    # Per-grid-step shapes (Bt = batch tile, 1 on multi-TC chips, B otherwise):
    #   x_ref : (Bt, S, K)  with K = C_in*M and x[b, s, c*M+m] = x_torch[b, m, s, c]
    #   gT_ref: (Bt, N, M)  with gT[b, n, m] == graph[b, m, n]
    #   wuc   : (K, 2H) bf16   buc: (1, 2H) f32     h0: (N, H) f32
    #   we1/we2a/we2b: (H, H) bf16    be1/be2: (1, H) f32
    #   wde/wdh: (C_out, N, H) f32    bd: (C_out, N) f32    out: (Bt, C_out, N) f32
    Bt, S, K = x_ref.shape
    _, N, M = gT_ref.shape
    H = h0_ref.shape[-1]
    C_in = K // M
    f32, bf16 = jnp.float32, jnp.bfloat16

    # ---- 1. Hoisted gate precompute (h-independent because concat_h=False) ----
    x_all = x_ref[...]                                        # (Bt, S, K)
    gT = gT_ref[...]                                          # (Bt, N, M)
    gTk = gT if C_in == 1 else jnp.tile(gT, (1, 1, C_in))     # (Bt, N, K)
    # msg[b, s, n, c*M+m] = x[b, m, s, c] * graph[b, m, n]
    msg = x_all[:, :, None, :] * gTk[:, None, :, :]           # (Bt, S, N, K)
    msg = msg.reshape(Bt * S * N, K)
    # TODO(synk): for large S*N, tile this precompute over S (extra "arbitrary"
    # grid axis / emit_pipeline over S-chunks) so the staging fits v7x's VMEM.
    uc = jnp.dot(msg.astype(bf16), wuc_ref[...],
                 preferred_element_type=f32) + buc_ref[...]   # (Bt*S*N, 2H) f32
    u_all = jax.nn.sigmoid(uc[:, :H]).reshape(Bt, S, N, H)    # update gate
    c_all = jnp.tanh(uc[:, H:]).reshape(Bt, S, N, H)          # candidate
    # forget gate omitted: dead compute when concat_h=False.

    # ---- 2. Recurrence: pure element-wise, carried in vregs -------------------
    # Full unroll (static loop) is the right choice for small S.
    # TODO(synk): for long sequences stage u_all/c_all in VMEM scratch and use
    # lax.fori_loop(..., unroll=8); the lane-dense (N*H//128, 128) carry layout
    # is also only worth its relayout cost at larger S.
    h = jnp.broadcast_to(h0_ref[...][None], (Bt, N, H))       # (Bt, N, H) f32
    for t in range(S):
        u_t = u_all[:, t]
        h = u_t * h + (1.0 - u_t) * c_all[:, t]

    # ---- 3. Prediction head, computed once (only the last step is returned) ---
    def lrelu(v):
        return jnp.where(v >= 0, v, 0.01 * v)                 # LeakyReLU(0.01)

    h2 = h.reshape(Bt * N, H)
    e1 = lrelu(jnp.dot(h2.astype(bf16), we1_ref[...],
                       preferred_element_type=f32) + be1_ref[...])      # (Bt*N, H)
    e2 = lrelu(jnp.dot(e1.astype(bf16), we2a_ref[...],
                       preferred_element_type=f32)
               + jnp.dot(h2.astype(bf16), we2b_ref[...],
                         preferred_element_type=f32)
               + be2_ref[...])                                           # (Bt*N, H)

    # LocalConv1D decoder (one 1x1 conv per node), f32 VPU + one cross-lane sum:
    #   out[b,o,n] = sum_k e2[b,n,k]*Wd[n,o,k] + sum_k h[b,n,k]*Wd[n,o,H+k] + bd[n,o]
    e2_3 = e2.reshape(Bt, N, H)
    prod = (e2_3[:, None, :, :] * wde_ref[...][None]
            + h[:, None, :, :] * wdh_ref[...][None])           # (Bt, C_out, N, H)
    out_ref[...] = jnp.sum(prod, axis=-1) + bd_ref[...][None]  # (Bt, C_out, N)


# ----------------------------------------------------------------------------- params
def prepare_params(params):
    """One-time layout conversion of the PyTorch-style parameters.
    Call once at parameter-load time, NOT in the per-forward path (perf item 7)."""
    H = params["be1"].shape[0]
    f32, bf16 = jnp.float32, jnp.bfloat16
    return dict(
        # fused update|candidate gate weights -> one (K, 2H) matmul (bf16 MXU operand)
        wuc=jnp.concatenate([params["Wu"].T, params["Wc"].T], axis=1).astype(bf16),
        buc=jnp.concatenate([params["bu"], params["bc"]]).reshape(1, 2 * H).astype(f32),
        h0=params["h0"].T.astype(f32),                                    # (N, H)
        we1=params["We1"].T.astype(bf16),                                 # (H, H)
        be1=params["be1"].reshape(1, H).astype(f32),
        # split We2 / Wd so the kernel never builds [e1, h] / [e2, h] lane concats
        we2a=params["We2"][:, :H].T.astype(bf16),                         # acts on e1
        we2b=params["We2"][:, H:].T.astype(bf16),                         # acts on h
        be2=params["be2"].reshape(1, H).astype(f32),
        wde=jnp.transpose(params["Wd"][:, :, :H], (1, 0, 2)).astype(f32), # (C_out,N,H) on e2
        wdh=jnp.transpose(params["Wd"][:, :, H:], (1, 0, 2)).astype(f32), # (C_out,N,H) on h
        bd=params["bd"].T.astype(f32),                                    # (C_out, N)
    )


# ----------------------------------------------------------------------------- wrapper
def cuts_plus_forward(x, mask, fwd_graph, prep):
    """x: (B, N, S, C_in); mask: unused (as in the PyTorch forward);
    fwd_graph: (B, N, N); prep: output of prepare_params.
    Returns (B, N, 1, C_out) == pred[:, :, -1:]."""
    del mask
    B, N, S, C_in = x.shape
    H = prep["h0"].shape[-1]
    C_out = prep["bd"].shape[0]
    K = C_in * N

    # activation layout glue only (weights are pre-laid-out in prepare_params)
    x_steps = jnp.transpose(x, (0, 2, 3, 1)).reshape(B, S, K).astype(jnp.float32)
    graph_T = jnp.transpose(fwd_graph, (0, 2, 1)).astype(jnp.float32)     # (B, N, M)

    # single-TC chips: collapse batch into one body; multi-TC: shard batch over cores
    bt = 1 if (_multi_tensorcore_chip() and B > 1) else B
    grid = (B // bt,)

    def const_spec(shape):
        nd = len(shape)
        return pl.BlockSpec(shape, lambda b, nd=nd: (0,) * nd)

    # NOTE (perf item 4): the constant operands below get the default double
    # buffer even though their block index never changes.  At N=16 that is
    # noise; at N >~ 512 single-buffer them (pipeline_mode=pl.Buffered(1) or
    # memory_space=pl.ANY + one-time copy) and raise vmem_limit_bytes — this is
    # what breaks the v7x 64 MiB budget first.
    out = pl.pallas_call(
        _cuts_plus_kernel,
        out_shape=jax.ShapeDtypeStruct((B, C_out, N), jnp.float32),
        grid=grid,
        in_specs=[
            pl.BlockSpec((bt, S, K), lambda b: (b, 0, 0)),       # x, batch-tiled
            pl.BlockSpec((bt, N, N), lambda b: (b, 0, 0)),       # graph^T, batch-tiled
            const_spec((K, 2 * H)), const_spec((1, 2 * H)),      # fused GRU gates
            const_spec((N, H)),                                  # h0
            const_spec((H, H)), const_spec((1, H)),              # encoder1
            const_spec((H, H)), const_spec((H, H)), const_spec((1, H)),   # encoder2 (split)
            const_spec((C_out, N, H)), const_spec((C_out, N, H)),         # local decoder (split)
            const_spec((C_out, N)),                                       # decoder bias
        ],
        out_specs=pl.BlockSpec((bt, C_out, N), lambda b: (b, 0, 0)),
        compiler_params=pltpu.CompilerParams(
            dimension_semantics=("parallel",)),                  # multi-TC: split batch
    )(x_steps, graph_T, prep["wuc"], prep["buc"], prep["h0"],
      prep["we1"], prep["be1"], prep["we2a"], prep["we2b"], prep["be2"],
      prep["wde"], prep["wdh"], prep["bd"])

    return jnp.transpose(out, (0, 2, 1))[:, :, None, :]          # (B, N, 1, C_out)


def init_params(key, n_nodes, in_ch, hidden_ch):
    """Deterministic synthetic parameters, PyTorch layouts (Conv1d: (c_out, c_in[,1]))."""
    ks = jax.random.split(key, 10)
    K = in_ch * n_nodes
    s = 0.1
    return dict(
        # GRU MPNN gates (forget gate omitted: dead compute when concat_h=False)
        Wu=s * jax.random.normal(ks[0], (hidden_ch, K), jnp.float32),
        bu=s * jax.random.normal(ks[1], (hidden_ch,), jnp.float32),
        Wc=s * jax.random.normal(ks[2], (hidden_ch, K), jnp.float32),
        bc=s * jax.random.normal(ks[3], (hidden_ch,), jnp.float32),
        # conv_encoder1 / conv_encoder2
        We1=s * jax.random.normal(ks[4], (hidden_ch, hidden_ch), jnp.float32),
        be1=s * jax.random.normal(ks[5], (hidden_ch,), jnp.float32),
        We2=s * jax.random.normal(ks[6], (hidden_ch, 2 * hidden_ch), jnp.float32),
        be2=s * jax.random.normal(ks[7], (hidden_ch,), jnp.float32),
        # LocalConv1D decoder: one (in_ch, 2H) conv per node
        Wd=s * jax.random.normal(ks[8], (n_nodes, in_ch, 2 * hidden_ch), jnp.float32),
        bd=s * jax.random.normal(ks[9], (n_nodes, in_ch), jnp.float32),
        # init_state: zeros parameter (hidden_ch, n_nodes)
        h0=jnp.zeros((hidden_ch, n_nodes), jnp.float32),
    )


# ----------------------------------------------------------------------------- reference
def reference_forward(x, fwd_graph, p):
    """Pure-JAX mirror of the PyTorch CUTS_Plus_Net.forward (n_layers=1, concat_h=False)."""
    B, N, S, C = x.shape
    H = p["be1"].shape[0]
    leaky = lambda v: jnp.where(v >= 0, v, 0.01 * v)
    xt = jnp.transpose(x, (0, 3, 1, 2))                     # b c n s
    h = jnp.broadcast_to(p["h0"][None], (B, H, N))

    def mpnn(x_in, W, b, graph):
        Bq, Cm, Nn = x_in.shape
        x_rep = jnp.broadcast_to(x_in[:, :, :, None], (Bq, Cm, Nn, Nn))
        msgs = jnp.einsum("bcmn,bmn->bcmn", x_rep, graph)
        msgs = msgs.reshape(Bq, Cm * Nn, Nn)
        return jnp.einsum("ok,bkn->bon", W, msgs) + b[None, :, None]

    preds = []
    for s in range(S):
        x_now = xt[..., s]
        u = jax.nn.sigmoid(mpnn(x_now, p["Wu"], p["bu"], fwd_graph))
        c = jnp.tanh(mpnn(x_now, p["Wc"], p["bc"], fwd_graph))
        h = u * h + (1.0 - u) * c
        e1 = leaky(jnp.einsum("oh,bhn->bon", p["We1"], h) + p["be1"][None, :, None])
        e2 = leaky(jnp.einsum("ok,bkn->bon", p["We2"],
                              jnp.concatenate([e1, h], axis=1)) + p["be2"][None, :, None])
        x_repr = jnp.concatenate([e2, h], axis=1)
        dec = jnp.einsum("noc,bcn->bon", p["Wd"], x_repr) + p["bd"].T[None, :, :]
        preds.append(dec)
    pred = jnp.stack(preds, axis=-1)                        # (B, C_out, N, S)
    pred = jnp.transpose(pred, (0, 2, 3, 1))                # (B, N, S, C_out)
    return pred[:, :, -1:]


# ----------------------------------------------------------------------------- main
if __name__ == "__main__":
    B, N_NODES, STEPS, IN_CH, HIDDEN = 2, 16, 8, 1, 32

    key = jax.random.PRNGKey(0)
    kx, kg, kp = jax.random.split(key, 3)
    x = jax.random.normal(kx, (B, N_NODES, STEPS, IN_CH), jnp.float32)   # (b, n, s, c)
    mask = jnp.ones((B, N_NODES, STEPS, IN_CH), jnp.float32)             # unused by forward
    fwd_graph = jax.nn.sigmoid(jax.random.normal(kg, (B, N_NODES, N_NODES), jnp.float32))
    params = init_params(kp, N_NODES, IN_CH, HIDDEN)

    prep = prepare_params(params)                # one-time weight layout (perf item 7)
    forward = jax.jit(cuts_plus_forward)
    out = jax.block_until_ready(forward(x, mask, fwd_graph, prep))

    ref = reference_forward(x, fwd_graph, params)
    assert out.shape == (B, N_NODES, 1, IN_CH), out.shape
    assert bool(jnp.all(jnp.isfinite(out)))
    # Tolerance covers single-pass bf16 MXU matmuls on both the kernel and the
    # (default-precision) reference einsums; a structural bug would be >> this.
    assert bool(jnp.allclose(out, ref, rtol=1e-3, atol=3e-3)), \
        float(jnp.max(jnp.abs(out - ref)))
    print("KERNEL_OK")
</pallas_src>

<mosaic_0001>
module attributes {stable_mosaic.version = 11 : i64} {
  func.func @_cuts_plus_kernel(%arg0: i32, %arg1: memref<2x8x16xf32, #tpu.memory_space<vmem>>, %arg2: memref<2x16x16xf32, #tpu.memory_space<vmem>>, %arg3: memref<16x64xbf16, #tpu.memory_space<vmem>>, %arg4: memref<1x64xf32, #tpu.memory_space<vmem>>, %arg5: memref<16x32xf32, #tpu.memory_space<vmem>>, %arg6: memref<32x32xbf16, #tpu.memory_space<vmem>>, %arg7: memref<1x32xf32, #tpu.memory_space<vmem>>, %arg8: memref<32x32xbf16, #tpu.memory_space<vmem>>, %arg9: memref<32x32xbf16, #tpu.memory_space<vmem>>, %arg10: memref<1x32xf32, #tpu.memory_space<vmem>>, %arg11: memref<1x16x32xf32, #tpu.memory_space<vmem>>, %arg12: memref<1x16x32xf32, #tpu.memory_space<vmem>>, %arg13: memref<1x16xf32, #tpu.memory_space<vmem>>, %arg14: memref<2x1x16xf32, #tpu.memory_space<vmem>>) attributes {dimension_semantics = [#tpu.dimension_semantics<parallel>], iteration_bounds = array<i64: 1>, scalar_prefetch = 0 : i64, scratch_operands = 0 : i64, tpu.core_type = #tpu.core_type<tc>, window_params = [{transform_indices = @transform_0, window_bounds = array<i64: 2, 8, 16>}, {transform_indices = @transform_1, window_bounds = array<i64: 2, 16, 16>}, {pipeline_mode = #tpu.pipeline_mode<synchronous>, transform_indices = @transform_2, window_bounds = array<i64: 16, 64>}, {pipeline_mode = #tpu.pipeline_mode<synchronous>, transform_indices = @transform_3, window_bounds = array<i64: 1, 64>}, {pipeline_mode = #tpu.pipeline_mode<synchronous>, transform_indices = @transform_4, window_bounds = array<i64: 16, 32>}, {pipeline_mode = #tpu.pipeline_mode<synchronous>, transform_indices = @transform_5, window_bounds = array<i64: 32, 32>}, {pipeline_mode = #tpu.pipeline_mode<synchronous>, transform_indices = @transform_6, window_bounds = array<i64: 1, 32>}, {pipeline_mode = #tpu.pipeline_mode<synchronous>, transform_indices = @transform_7, window_bounds = array<i64: 32, 32>}, {pipeline_mode = #tpu.pipeline_mode<synchronous>, transform_indices = @transform_8, window_bounds = array<i64: 32, 32>}, {pipeline_mode = #tpu.pipeline_mode<synchronous>, transform_indices = @transform_9, window_bounds = array<i64: 1, 32>}, {pipeline_mode = #tpu.pipeline_mode<synchronous>, transform_indices = @transform_10, window_bounds = array<i64: 1, 16, 32>}, {pipeline_mode = #tpu.pipeline_mode<synchronous>, transform_indices = @transform_11, window_bounds = array<i64: 1, 16, 32>}, {pipeline_mode = #tpu.pipeline_mode<synchronous>, transform_indices = @transform_12, window_bounds = array<i64: 1, 16>}, {transform_indices = @transform_13, window_bounds = array<i64: 2, 1, 16>}]} {
    %c0 = arith.constant 0 : index
    %c0_0 = arith.constant 0 : index
    %c0_1 = arith.constant 0 : index
    %0 = vector.load %arg1[%c0, %c0_0, %c0_1] : memref<2x8x16xf32, #tpu.memory_space<vmem>>, vector<2x8x16xf32>
    %c0_2 = arith.constant 0 : index
    %c0_3 = arith.constant 0 : index
    %c0_4 = arith.constant 0 : index
    %1 = vector.load %arg2[%c0_2, %c0_3, %c0_4] : memref<2x16x16xf32, #tpu.memory_space<vmem>>, vector<2x16x16xf32>
    %2 = vector.shape_cast %0 : vector<2x8x16xf32> to vector<2x8x1x16xf32>
    %3 = vector.shape_cast %1 : vector<2x16x16xf32> to vector<2x1x16x16xf32>
    %4 = vector.broadcast %2 : vector<2x8x1x16xf32> to vector<2x8x16x16xf32>
    %5 = vector.broadcast %3 : vector<2x1x16x16xf32> to vector<2x8x16x16xf32>
    %6 = arith.mulf %4, %5 : vector<2x8x16x16xf32>
    %7 = vector.shape_cast %6 : vector<2x8x16x16xf32> to vector<256x16xf32>
    %8 = arith.truncf %7 : vector<256x16xf32> to vector<256x16xbf16>
    %c0_5 = arith.constant 0 : index
    %c0_6 = arith.constant 0 : index
    %9 = vector.load %arg3[%c0_5, %c0_6] : memref<16x64xbf16, #tpu.memory_space<vmem>>, vector<16x64xbf16>
    %cst = arith.constant dense<0.000000e+00> : vector<256x64xf32>
    %10 = tpu.matmul %8, %9, %cst {dimension_numbers = #tpu.dot_dimension_numbers<[1], [0], [0], [1], [0, 0, 1, 1], [], []>} : vector<256x16xbf16>, vector<16x64xbf16>, vector<256x64xf32> -> vector<256x64xf32>
    %c0_7 = arith.constant 0 : index
    %c0_8 = arith.constant 0 : index
    %11 = vector.load %arg4[%c0_7, %c0_8] : memref<1x64xf32, #tpu.memory_space<vmem>>, vector<1x64xf32>
    %12 = vector.broadcast %11 : vector<1x64xf32> to vector<256x64xf32>
    %13 = arith.addf %10, %12 : vector<256x64xf32>
    %14 = vector.extract_strided_slice %13 {offsets = [0, 0], sizes = [256, 32], strides = [1, 1]} : vector<256x64xf32> to vector<256x32xf32>
    %15 = arith.negf %14 : vector<256x32xf32>
    %16 = math.exp %15 : vector<256x32xf32>
    %cst_9 = arith.constant 1.000000e+00 : f32
    %17 = vector.broadcast %cst_9 : f32 to vector<256x32xf32>
    %18 = arith.addf %17, %16 : vector<256x32xf32>
    %19 = arith.divf %17, %18 : vector<256x32xf32>
    %20 = vector.shape_cast %19 : vector<256x32xf32> to vector<2x8x16x32xf32>
    %21 = vector.extract_strided_slice %13 {offsets = [0, 32], sizes = [256, 32], strides = [1, 1]} : vector<256x64xf32> to vector<256x32xf32>
    %22 = math.tanh %21 : vector<256x32xf32>
    %23 = vector.shape_cast %22 : vector<256x32xf32> to vector<2x8x16x32xf32>
    %c0_10 = arith.constant 0 : index
    %c0_11 = arith.constant 0 : index
    %24 = vector.load %arg5[%c0_10, %c0_11] : memref<16x32xf32, #tpu.memory_space<vmem>>, vector<16x32xf32>
    %25 = vector.shape_cast %24 : vector<16x32xf32> to vector<1x16x32xf32>
    %26 = vector.shape_cast %25 : vector<1x16x32xf32> to vector<1x16x32xf32>
    %27 = vector.broadcast %26 : vector<1x16x32xf32> to vector<2x16x32xf32>
    %28 = vector.extract_strided_slice %20 {offsets = [0, 0, 0, 0], sizes = [2, 1, 16, 32], strides = [1, 1, 1, 1]} : vector<2x8x16x32xf32> to vector<2x1x16x32xf32>
    %29 = vector.shape_cast %28 : vector<2x1x16x32xf32> to vector<2x16x32xf32>
    %30 = arith.mulf %29, %27 : vector<2x16x32xf32>
    %cst_12 = arith.constant 1.000000e+00 : f32
    %31 = vector.broadcast %cst_12 : f32 to vector<2x16x32xf32>
    %32 = arith.subf %31, %29 : vector<2x16x32xf32>
    %33 = vector.extract_strided_slice %23 {offsets = [0, 0, 0, 0], sizes = [2, 1, 16, 32], strides = [1, 1, 1, 1]} : vector<2x8x16x32xf32> to vector<2x1x16x32xf32>
    %34 = vector.shape_cast %33 : vector<2x1x16x32xf32> to vector<2x16x32xf32>
    %35 = arith.mulf %32, %34 : vector<2x16x32xf32>
    %36 = arith.addf %30, %35 : vector<2x16x32xf32>
    %37 = vector.extract_strided_slice %20 {offsets = [0, 1, 0, 0], sizes = [2, 1, 16, 32], strides = [1, 1, 1, 1]} : vector<2x8x16x32xf32> to vector<2x1x16x32xf32>
    %38 = vector.shape_cast %37 : vector<2x1x16x32xf32> to vector<2x16x32xf32>
    %39 = arith.mulf %38, %36 : vector<2x16x32xf32>
    %cst_13 = arith.constant 1.000000e+00 : f32
    %40 = vector.broadcast %cst_13 : f32 to vector<2x16x32xf32>
    %41 = arith.subf %40, %38 : vector<2x16x32xf32>
    %42 = vector.extract_strided_slice %23 {offsets = [0, 1, 0, 0], sizes = [2, 1, 16, 32], strides = [1, 1, 1, 1]} : vector<2x8x16x32xf32> to vector<2x1x16x32xf32>
    %43 = vector.shape_cast %42 : vector<2x1x16x32xf32> to vector<2x16x32xf32>
    %44 = arith.mulf %41, %43 : vector<2x16x32xf32>
    %45 = arith.addf %39, %44 : vector<2x16x32xf32>
    %46 = vector.extract_strided_slice %20 {offsets = [0, 2, 0, 0], sizes = [2, 1, 16, 32], strides = [1, 1, 1, 1]} : vector<2x8x16x32xf32> to vector<2x1x16x32xf32>
    %47 = vector.shape_cast %46 : vector<2x1x16x32xf32> to vector<2x16x32xf32>
    %48 = arith.mulf %47, %45 : vector<2x16x32xf32>
    %cst_14 = arith.constant 1.000000e+00 : f32
    %49 = vector.broadcast %cst_14 : f32 to vector<2x16x32xf32>
    %50 = arith.subf %49, %47 : vector<2x16x32xf32>
    %51 = vector.extract_strided_slice %23 {offsets = [0, 2, 0, 0], sizes = [2, 1, 16, 32], strides = [1, 1, 1, 1]} : vector<2x8x16x32xf32> to vector<2x1x16x32xf32>
    %52 = vector.shape_cast %51 : vector<2x1x16x32xf32> to vector<2x16x32xf32>
    %53 = arith.mulf %50, %52 : vector<2x16x32xf32>
    %54 = arith.addf %48, %53 : vector<2x16x32xf32>
    %55 = vector.extract_strided_slice %20 {offsets = [0, 3, 0, 0], sizes = [2, 1, 16, 32], strides = [1, 1, 1, 1]} : vector<2x8x16x32xf32> to vector<2x1x16x32xf32>
    %56 = vector.shape_cast %55 : vector<2x1x16x32xf32> to vector<2x16x32xf32>
    %57 = arith.mulf %56, %54 : vector<2x16x32xf32>
    %cst_15 = arith.constant 1.000000e+00 : f32
    %58 = vector.broadcast %cst_15 : f32 to vector<2x16x32xf32>
    %59 = arith.subf %58, %56 : vector<2x16x32xf32>
    %60 = vector.extract_strided_slice %23 {offsets = [0, 3, 0, 0], sizes = [2, 1, 16, 32], strides = [1, 1, 1, 1]} : vector<2x8x16x32xf32> to vector<2x1x16x32xf32>
    %61 = vector.shape_cast %60 : vector<2x1x16x32xf32> to vector<2x16x32xf32>
    %62 = arith.mulf %59, %61 : vector<2x16x32xf32>
    %63 = arith.addf %57, %62 : vector<2x16x32xf32>
    %64 = vector.extract_strided_slice %20 {offsets = [0, 4, 0, 0], sizes = [2, 1, 16, 32], strides = [1, 1, 1, 1]} : vector<2x8x16x32xf32> to vector<2x1x16x32xf32>
    %65 = vector.shape_cast %64 : vector<2x1x16x32xf32> to vector<2x16x32xf32>
    %66 = arith.mulf %65, %63 : vector<2x16x32xf32>
    %cst_16 = arith.constant 1.000000e+00 : f32
    %67 = vector.broadcast %cst_16 : f32 to vector<2x16x32xf32>
    %68 = arith.subf %67, %65 : vector<2x16x32xf32>
    %69 = vector.extract_strided_slice %23 {offsets = [0, 4, 0, 0], sizes = [2, 1, 16, 32], strides = [1, 1, 1, 1]} : vector<2x8x16x32xf32> to vector<2x1x16x32xf32>
    %70 = vector.shape_cast %69 : vector<2x1x16x32xf32> to vector<2x16x32xf32>
    %71 = arith.mulf %68, %70 : vector<2x16x32xf32>
    %72 = arith.addf %66, %71 : vector<2x16x32xf32>
    %73 = vector.extract_strided_slice %20 {offsets = [0, 5, 0, 0], sizes = [2, 1, 16, 32], strides = [1, 1, 1, 1]} : vector<2x8x16x32xf32> to vector<2x1x16x32xf32>
    %74 = vector.shape_cast %73 : vector<2x1x16x32xf32> to vector<2x16x32xf32>
    %75 = arith.mulf %74, %72 : vector<2x16x32xf32>
    %cst_17 = arith.constant 1.000000e+00 : f32
    %76 = vector.broadcast %cst_17 : f32 to vector<2x16x32xf32>
    %77 = arith.subf %76, %74 : vector<2x16x32xf32>
    %78 = vector.extract_strided_slice %23 {offsets = [0, 5, 0, 0], sizes = [2, 1, 16, 32], strides = [1, 1, 1, 1]} : vector<2x8x16x32xf32> to vector<2x1x16x32xf32>
    %79 = vector.shape_cast %78 : vector<2x1x16x32xf32> to vector<2x16x32xf32>
    %80 = arith.mulf %77, %79 : vector<2x16x32xf32>
    %81 = arith.addf %75, %80 : vector<2x16x32xf32>
    %82 = vector.extract_strided_slice %20 {offsets = [0, 6, 0, 0], sizes = [2, 1, 16, 32], strides = [1, 1, 1, 1]} : vector<2x8x16x32xf32> to vector<2x1x16x32xf32>
    %83 = vector.shape_cast %82 : vector<2x1x16x32xf32> to vector<2x16x32xf32>
    %84 = arith.mulf %83, %81 : vector<2x16x32xf32>
    %cst_18 = arith.constant 1.000000e+00 : f32
    %85 = vector.broadcast %cst_18 : f32 to vector<2x16x32xf32>
    %86 = arith.subf %85, %83 : vector<2x16x32xf32>
    %87 = vector.extract_strided_slice %23 {offsets = [0, 6, 0, 0], sizes = [2, 1, 16, 32], strides = [1, 1, 1, 1]} : vector<2x8x16x32xf32> to vector<2x1x16x32xf32>
    %88 = vector.shape_cast %87 : vector<2x1x16x32xf32> to vector<2x16x32xf32>
    %89 = arith.mulf %86, %88 : vector<2x16x32xf32>
    %90 = arith.addf %84, %89 : vector<2x16x32xf32>
    %91 = vector.extract_strided_slice %20 {offsets = [0, 7, 0, 0], sizes = [2, 1, 16, 32], strides = [1, 1, 1, 1]} : vector<2x8x16x32xf32> to vector<2x1x16x32xf32>
    %92 = vector.shape_cast %91 : vector<2x1x16x32xf32> to vector<2x16x32xf32>
    %93 = arith.mulf %92, %90 : vector<2x16x32xf32>
    %cst_19 = arith.constant 1.000000e+00 : f32
    %94 = vector.broadcast %cst_19 : f32 to vector<2x16x32xf32>
    %95 = arith.subf %94, %92 : vector<2x16x32xf32>
    %96 = vector.extract_strided_slice %23 {offsets = [0, 7, 0, 0], sizes = [2, 1, 16, 32], strides = [1, 1, 1, 1]} : vector<2x8x16x32xf32> to vector<2x1x16x32xf32>
    %97 = vector.shape_cast %96 : vector<2x1x16x32xf32> to vector<2x16x32xf32>
    %98 = arith.mulf %95, %97 : vector<2x16x32xf32>
    %99 = arith.addf %93, %98 : vector<2x16x32xf32>
    %100 = vector.shape_cast %99 : vector<2x16x32xf32> to vector<32x32xf32>
    %101 = arith.truncf %100 : vector<32x32xf32> to vector<32x32xbf16>
    %c0_20 = arith.constant 0 : index
    %c0_21 = arith.constant 0 : index
    %102 = vector.load %arg6[%c0_20, %c0_21] : memref<32x32xbf16, #tpu.memory_space<vmem>>, vector<32x32xbf16>
    %cst_22 = arith.constant dense<0.000000e+00> : vector<32x32xf32>
    %103 = tpu.matmul %101, %102, %cst_22 {dimension_numbers = #tpu.dot_dimension_numbers<[1], [0], [0], [1], [0, 0, 1, 1], [], []>} : vector<32x32xbf16>, vector<32x32xbf16>, vector<32x32xf32> -> vector<32x32xf32>
    %c0_23 = arith.constant 0 : index
    %c0_24 = arith.constant 0 : index
    %104 = vector.load %arg7[%c0_23, %c0_24] : memref<1x32xf32, #tpu.memory_space<vmem>>, vector<1x32xf32>
    %105 = vector.broadcast %104 : vector<1x32xf32> to vector<32x32xf32>
    %106 = arith.addf %103, %105 : vector<32x32xf32>
    %cst_25 = arith.constant 0.000000e+00 : f32
    %107 = vector.broadcast %cst_25 : f32 to vector<32x32xf32>
    %108 = arith.cmpf oge, %106, %107 : vector<32x32xf32>
    %cst_26 = arith.constant 0.00999999977 : f32
    %109 = vector.broadcast %cst_26 : f32 to vector<32x32xf32>
    %110 = arith.mulf %109, %106 : vector<32x32xf32>
    %111 = arith.select %108, %106, %110 : vector<32x32xi1>, vector<32x32xf32>
    %112 = arith.truncf %111 : vector<32x32xf32> to vector<32x32xbf16>
    %c0_27 = arith.constant 0 : index
    %c0_28 = arith.constant 0 : index
    %113 = vector.load %arg8[%c0_27, %c0_28] : memref<32x32xbf16, #tpu.memory_space<vmem>>, vector<32x32xbf16>
    %cst_29 = arith.constant dense<0.000000e+00> : vector<32x32xf32>
    %114 = tpu.matmul %112, %113, %cst_29 {dimension_numbers = #tpu.dot_dimension_numbers<[1], [0], [0], [1], [0, 0, 1, 1], [], []>} : vector<32x32xbf16>, vector<32x32xbf16>, vector<32x32xf32> -> vector<32x32xf32>
    %115 = arith.truncf %100 : vector<32x32xf32> to vector<32x32xbf16>
    %c0_30 = arith.constant 0 : index
    %c0_31 = arith.constant 0 : index
    %116 = vector.load %arg9[%c0_30, %c0_31] : memref<32x32xbf16, #tpu.memory_space<vmem>>, vector<32x32xbf16>
    %cst_32 = arith.constant dense<0.000000e+00> : vector<32x32xf32>
    %117 = tpu.matmul %115, %116, %cst_32 {dimension_numbers = #tpu.dot_dimension_numbers<[1], [0], [0], [1], [0, 0, 1, 1], [], []>} : vector<32x32xbf16>, vector<32x32xbf16>, vector<32x32xf32> -> vector<32x32xf32>
    %118 = arith.addf %114, %117 : vector<32x32xf32>
    %c0_33 = arith.constant 0 : index
    %c0_34 = arith.constant 0 : index
    %119 = vector.load %arg10[%c0_33, %c0_34] : memref<1x32xf32, #tpu.memory_space<vmem>>, vector<1x32xf32>
    %120 = vector.broadcast %119 : vector<1x32xf32> to vector<32x32xf32>
    %121 = arith.addf %118, %120 : vector<32x32xf32>
    %cst_35 = arith.constant 0.000000e+00 : f32
    %122 = vector.broadcast %cst_35 : f32 to vector<32x32xf32>
    %123 = arith.cmpf oge, %121, %122 : vector<32x32xf32>
    %cst_36 = arith.constant 0.00999999977 : f32
    %124 = vector.broadcast %cst_36 : f32 to vector<32x32xf32>
    %125 = arith.mulf %124, %121 : vector<32x32xf32>
    %126 = arith.select %123, %121, %125 : vector<32x32xi1>, vector<32x32xf32>
    %127 = vector.shape_cast %126 : vector<32x32xf32> to vector<2x16x32xf32>
    %128 = vector.shape_cast %127 : vector<2x16x32xf32> to vector<2x1x16x32xf32>
    %c0_37 = arith.constant 0 : index
    %c0_38 = arith.constant 0 : index
    %c0_39 = arith.constant 0 : index
    %129 = vector.load %arg11[%c0_37, %c0_38, %c0_39] : memref<1x16x32xf32, #tpu.memory_space<vmem>>, vector<1x16x32xf32>
    %130 = vector.shape_cast %129 : vector<1x16x32xf32> to vector<1x1x16x32xf32>
    %131 = vector.broadcast %130 : vector<1x1x16x32xf32> to vector<2x1x16x32xf32>
    %132 = arith.mulf %128, %131 : vector<2x1x16x32xf32>
    %133 = vector.shape_cast %99 : vector<2x16x32xf32> to vector<2x1x16x32xf32>
    %c0_40 = arith.constant 0 : index
    %c0_41 = arith.constant 0 : index
    %c0_42 = arith.constant 0 : index
    %134 = vector.load %arg12[%c0_40, %c0_41, %c0_42] : memref<1x16x32xf32, #tpu.memory_space<vmem>>, vector<1x16x32xf32>
    %135 = vector.shape_cast %134 : vector<1x16x32xf32> to vector<1x1x16x32xf32>
    %136 = vector.broadcast %135 : vector<1x1x16x32xf32> to vector<2x1x16x32xf32>
    %137 = arith.mulf %133, %136 : vector<2x1x16x32xf32>
    %138 = arith.addf %132, %137 : vector<2x1x16x32xf32>
    %cst_43 = arith.constant dense<0.000000e+00> : vector<2x1x16xf32>
    %139 = vector.multi_reduction <add>, %138, %cst_43 [3] : vector<2x1x16x32xf32> to vector<2x1x16xf32>
    %c0_44 = arith.constant 0 : index
    %c0_45 = arith.constant 0 : index
    %140 = vector.load %arg13[%c0_44, %c0_45] : memref<1x16xf32, #tpu.memory_space<vmem>>, vector<1x16xf32>
    %141 = vector.shape_cast %140 : vector<1x16xf32> to vector<1x1x16xf32>
    %142 = vector.broadcast %141 : vector<1x1x16xf32> to vector<2x1x16xf32>
    %143 = arith.addf %139, %142 : vector<2x1x16xf32>
    %c0_46 = arith.constant 0 : index
    %c0_47 = arith.constant 0 : index
    %c0_48 = arith.constant 0 : index
    %144 = vector.load %arg14[%c0_46, %c0_47, %c0_48] : memref<2x1x16xf32, #tpu.memory_space<vmem>>, vector<2x1x16xf32>
    tpu.vector_store %arg14[%c0_46, %c0_47, %c0_48], %143 {strides = array<i32>} : memref<2x1x16xf32, #tpu.memory_space<vmem>>, vector<2x1x16xf32>,
    return
  }
  func.func @transform_0(%arg0: i32) -> (i32, i32, i32) {
    %c0_i32 = arith.constant 0 : i32
    %c0_i32_0 = arith.constant 0 : i32
    %c0_i32_1 = arith.constant 0 : i32
    return %arg0, %c0_i32, %c0_i32_0 : i32, i32, i32
  }
  func.func @transform_1(%arg0: i32) -> (i32, i32, i32) {
    %c0_i32 = arith.constant 0 : i32
    %c0_i32_0 = arith.constant 0 : i32
    %c0_i32_1 = arith.constant 0 : i32
    return %arg0, %c0_i32, %c0_i32_0 : i32, i32, i32
  }
  func.func @transform_2(%arg0: i32) -> (i32, i32) {
    %c0_i32 = arith.constant 0 : i32
    %c0_i32_0 = arith.constant 0 : i32
    %c0_i32_1 = arith.constant 0 : i32
    return %c0_i32, %c0_i32_0 : i32, i32
  }
  func.func @transform_3(%arg0: i32) -> (i32, i32) {
    %c0_i32 = arith.constant 0 : i32
    %c0_i32_0 = arith.constant 0 : i32
    %c0_i32_1 = arith.constant 0 : i32
    return %c0_i32, %c0_i32_0 : i32, i32
  }
  func.func @transform_4(%arg0: i32) -> (i32, i32) {
    %c0_i32 = arith.constant 0 : i32
    %c0_i32_0 = arith.constant 0 : i32
    %c0_i32_1 = arith.constant 0 : i32
    return %c0_i32, %c0_i32_0 : i32, i32
  }
  func.func @transform_5(%arg0: i32) -> (i32, i32) {
    %c0_i32 = arith.constant 0 : i32
    %c0_i32_0 = arith.constant 0 : i32
    %c0_i32_1 = arith.constant 0 : i32
    return %c0_i32, %c0_i32_0 : i32, i32
  }
  func.func @transform_6(%arg0: i32) -> (i32, i32) {
    %c0_i32 = arith.constant 0 : i32
    %c0_i32_0 = arith.constant 0 : i32
    %c0_i32_1 = arith.constant 0 : i32
    return %c0_i32, %c0_i32_0 : i32, i32
  }
  func.func @transform_7(%arg0: i32) -> (i32, i32) {
    %c0_i32 = arith.constant 0 : i32
    %c0_i32_0 = arith.constant 0 : i32
    %c0_i32_1 = arith.constant 0 : i32
    return %c0_i32, %c0_i32_0 : i32, i32
  }
  func.func @transform_8(%arg0: i32) -> (i32, i32) {
    %c0_i32 = arith.constant 0 : i32
    %c0_i32_0 = arith.constant 0 : i32
    %c0_i32_1 = arith.constant 0 : i32
    return %c0_i32, %c0_i32_0 : i32, i32
  }
  func.func @transform_9(%arg0: i32) -> (i32, i32) {
    %c0_i32 = arith.constant 0 : i32
    %c0_i32_0 = arith.constant 0 : i32
    %c0_i32_1 = arith.constant 0 : i32
    return %c0_i32, %c0_i32_0 : i32, i32
  }
  func.func @transform_10(%arg0: i32) -> (i32, i32, i32) {
    %c0_i32 = arith.constant 0 : i32
    %c0_i32_0 = arith.constant 0 : i32
    %c0_i32_1 = arith.constant 0 : i32
    %c0_i32_2 = arith.constant 0 : i32
    return %c0_i32, %c0_i32_0, %c0_i32_1 : i32, i32, i32
  }
  func.func @transform_11(%arg0: i32) -> (i32, i32, i32) {
    %c0_i32 = arith.constant 0 : i32
    %c0_i32_0 = arith.constant 0 : i32
    %c0_i32_1 = arith.constant 0 : i32
    %c0_i32_2 = arith.constant 0 : i32
    return %c0_i32, %c0_i32_0, %c0_i32_1 : i32, i32, i32
  }
  func.func @transform_12(%arg0: i32) -> (i32, i32) {
    %c0_i32 = arith.constant 0 : i32
    %c0_i32_0 = arith.constant 0 : i32
    %c0_i32_1 = arith.constant 0 : i32
    return %c0_i32, %c0_i32_0 : i32, i32
  }
  func.func @transform_13(%arg0: i32) -> (i32, i32, i32) {
    %c0_i32 = arith.constant 0 : i32
    %c0_i32_0 = arith.constant 0 : i32
    %c0_i32_1 = arith.constant 0 : i32
    return %arg0, %c0_i32, %c0_i32_0 : i32, i32, i32
  }
}

</mosaic_0001>

<llo_original>
// kernel: cuts_plus_forward.1
$region0: #{cuts_plus_forward.1}
  #allocation0 [shape = 'u32[]', space=smem, size = 0x4, offset = 0x4, fixed_abs, tag = 'smem constant byte address 0x4 - core index']
  #allocation1 [shape = 'u32[144,128]{1,0:T(1,128)}', space=vmem, size = 0x12000, scoped, tag = 'internal scratch']
  %s0 = inlined_call_operand.vmem [shape: f32[2,8,16], index: 0, kind: input, shape index: {}]
  %s1 = inlined_call_operand.vmem [shape: f32[2,16,16], index: 1, kind: input, shape index: {}]
  %s2 = inlined_call_operand.vmem [shape: bf16[16,64], index: 2, kind: input, shape index: {}]
  %s3 = inlined_call_operand.vmem [shape: f32[1,64], index: 3, kind: input, shape index: {}]
  %s4 = inlined_call_operand.vmem [shape: f32[16,32], index: 4, kind: input, shape index: {}]
  %s5 = inlined_call_operand.vmem [shape: bf16[32,32], index: 5, kind: input, shape index: {}]
  %s6 = inlined_call_operand.hbm [shape: f32[1,32], index: 6, kind: input, shape index: {}]
  %s7 = inlined_call_operand.vmem [shape: bf16[32,32], index: 7, kind: input, shape index: {}]
  %s8 = inlined_call_operand.vmem [shape: bf16[32,32], index: 8, kind: input, shape index: {}]
  %s9 = inlined_call_operand.hbm [shape: f32[1,32], index: 9, kind: input, shape index: {}]
  %s10 = inlined_call_operand.vmem [shape: f32[1,16,32], index: 10, kind: input, shape index: {}]
  %s11 = inlined_call_operand.hbm [shape: f32[1,16,32], index: 11, kind: input, shape index: {}]
  %s12 = inlined_call_operand.hbm [shape: f32[1,16], index: 12, kind: input, shape index: {}]
  %s13 = inlined_call_operand.hbm [shape: f32[2,1,16], index: 13, kind: output, shape index: {}]
  %s14 = sld [smem:[#allocation0]]
  $region78: #{cuts_plus_forward.1} parent=0
    _
  %s16 = ssub.s32 1, %s14
  %s17 = scalar_select 0, %s16, %s14
  $region1: #{cuts_plus_forward.1} parent=0
    #allocation2 [shape = 'u8[512]{0}', space=vmem, size = 0x400, scoped, tag = 'input window, operand 6, single buffered']
    #allocation3 [shape = 's32[1]{0}', space=sflag, size = 0x4, scoped, tag = 'scoped memory for cuts_plus_forward.1']
    #allocation4 [shape = 's32[1]{0}', space=sflag, size = 0x4, scoped, tag = 'scoped memory for cuts_plus_forward.1']
    #allocation5 [shape = 'u8[512]{0}', space=vmem, size = 0x400, scoped, tag = 'input window, operand 9, single buffered']
    #allocation6 [shape = 's32[1]{0}', space=sflag, size = 0x4, scoped, tag = 'scoped memory for cuts_plus_forward.1']
    #allocation7 [shape = 'u8[8192]{0}', space=vmem, size = 0x2000, scoped, tag = 'input window, operand 11, single buffered']
    #allocation8 [shape = 'u8[512]{0}', space=vmem, size = 0x400, scoped, tag = 'input window, operand 12, single buffered']
    #allocation9 [shape = 's32[1]{0}', space=sflag, size = 0x4, scoped, tag = 'scoped memory for cuts_plus_forward.1']
    #allocation10 [shape = 'u8[1024]{0}', space=vmem, size = 0x400, scoped, tag = 'output window, operand 0, single buffered']
    %18 = vsyncpa [#allocation3], 0
    %19 = vsyncpa [#allocation6], 0
    %20 = vsyncpa [#allocation9], 0
    %21 = vsyncpa [#allocation4], 0
    // Predicated region
    $region2: #{cuts_plus_forward.1} parent=1 // pred_check
      _
    $region3: #{cuts_plus_forward.1} parent=1 // pred_check_branch
      %23 = sbr.rel (0) target = $region5
    $region4: #{cuts_plus_forward.1} parent=1 // pred_region
      _
    $region5: #{cuts_plus_forward.1} parent=1 // pred_fallthru
      _
    // Predicated region
    $region6: #{cuts_plus_forward.1} parent=1 // pred_check
      _
    $region7: #{cuts_plus_forward.1} parent=1 // pred_check_branch
      %25 = sbr.rel (0) target = $region9
    $region8: #{cuts_plus_forward.1} parent=1 // pred_region
      _
    $region9: #{cuts_plus_forward.1} parent=1 // pred_fallthru
      _
    // Predicated region
    $region10: #{cuts_plus_forward.1} parent=1 // pred_check
      _
    $region11: #{cuts_plus_forward.1} parent=1 // pred_check_branch
      %27 = sbr.rel (0) target = $region13
    $region12: #{cuts_plus_forward.1} parent=1 // pred_region
      _
    $region13: #{cuts_plus_forward.1} parent=1 // pred_fallthru
      _
    // Predicated region
    $region14: #{cuts_plus_forward.1} parent=1 // pred_check
      _
    $region15: #{cuts_plus_forward.1} parent=1 // pred_check_branch
      %29 = sbr.rel (0) target = $region17
    $region16: #{cuts_plus_forward.1} parent=1 // pred_region
      _
    $region17: #{cuts_plus_forward.1} parent=1 // pred_fallthru
      _
    // Predicated region
    $region18: #{cuts_plus_forward.1} parent=1 // pred_check
      _
    $region19: #{cuts_plus_forward.1} parent=1 // pred_check_branch
      %31 = sbr.rel (0) target = $region21
    $region20: #{cuts_plus_forward.1} parent=1 // pred_region
      _
    $region21: #{cuts_plus_forward.1} parent=1 // pred_fallthru
      _
    // Predicated region
    $region22: #{cuts_plus_forward.1} parent=1 // pred_check
      _
    $region23: #{cuts_plus_forward.1} parent=1 // pred_check_branch
      %33 = sbr.rel (0) target = $region25
    $region24: #{cuts_plus_forward.1} parent=1 // pred_region
      _
    $region25: #{cuts_plus_forward.1} parent=1 // pred_fallthru
      _
    // Predicated region
    $region26: #{cuts_plus_forward.1} parent=1 // pred_check
      _
    $region27: #{cuts_plus_forward.1} parent=1 // pred_check_branch
      %35 = sbr.rel (0) target = $region29
    $region28: #{cuts_plus_forward.1} parent=1 // pred_region
      %s37 = ssub.s32 16, 16
      %38 = vsyncadd [#allocation3], %s37
      %s40 = sshll.u32 [#allocation2], 4
      %s41 = int_to_ptr.vmem [resolvable:$true] %s40
      %43 = dma.hbm_to_vmem [thread:$0]  %s6, 16, %s41, [#allocation3]
    $region29: #{cuts_plus_forward.1} parent=1 // pred_fallthru
      _
    // Predicated region
    $region30: #{cuts_plus_forward.1} parent=1 // pred_check
      _
    $region31: #{cuts_plus_forward.1} parent=1 // pred_check_branch
      %45 = sbr.rel (0) target = $region33
    $region32: #{cuts_plus_forward.1} parent=1 // pred_region
      _
    $region33: #{cuts_plus_forward.1} parent=1 // pred_fallthru
      _
    // Predicated region
    $region34: #{cuts_plus_forward.1} parent=1 // pred_check
      _
    $region35: #{cuts_plus_forward.1} parent=1 // pred_check_branch
      %47 = sbr.rel (0) target = $region37
    $region36: #{cuts_plus_forward.1} parent=1 // pred_region
      _
    $region37: #{cuts_plus_forward.1} parent=1 // pred_fallthru
      _
    // Predicated region
    $region38: #{cuts_plus_forward.1} parent=1 // pred_check
      _
    $region39: #{cuts_plus_forward.1} parent=1 // pred_check_branch
      %49 = sbr.rel (0) target = $region41
    $region40: #{cuts_plus_forward.1} parent=1 // pred_region
      %s51 = ssub.s32 16, 16
      %52 = vsyncadd [#allocation6], %s51
      %s54 = sshll.u32 [#allocation5], 4
      %s55 = int_to_ptr.vmem [resolvable:$true] %s54
      %57 = dma.hbm_to_vmem [thread:$0]  %s9, 16, %s55, [#allocation6]
    $region41: #{cuts_plus_forward.1} parent=1 // pred_fallthru
      _
    // Predicated region
    $region42: #{cuts_plus_forward.1} parent=1 // pred_check
      _
    $region43: #{cuts_plus_forward.1} parent=1 // pred_check_branch
      %59 = sbr.rel (0) target = $region45
    $region44: #{cuts_plus_forward.1} parent=1 // pred_region
      _
    $region45: #{cuts_plus_forward.1} parent=1 // pred_fallthru
      _
    // Predicated region
    $region46: #{cuts_plus_forward.1} parent=1 // pred_check
      _
    $region47: #{cuts_plus_forward.1} parent=1 // pred_check_branch
      %61 = sbr.rel (0) target = $region49
    $region48: #{cuts_plus_forward.1} parent=1 // pred_region
      %s63 = ssub.s32 256, 256
      %64 = vsyncadd [#allocation6], %s63
      %s65 = sshll.u32 [#allocation7], 4
      %s66 = int_to_ptr.vmem [resolvable:$true] %s65
      %71 = dma.hbm_to_vmem [thread:$0]  %s11, 256, %s66, [#allocation6], 128, 128, 8
    $region49: #{cuts_plus_forward.1} parent=1 // pred_fallthru
      _
    // Predicated region
    $region50: #{cuts_plus_forward.1} parent=1 // pred_check
      _
    $region51: #{cuts_plus_forward.1} parent=1 // pred_check_branch
      %73 = sbr.rel (0) target = $region53
    $region52: #{cuts_plus_forward.1} parent=1 // pred_region
      %s75 = ssub.s32 16, 16
      %76 = vsyncadd [#allocation9], %s75
      %s78 = sshll.u32 [#allocation8], 4
      %s79 = int_to_ptr.vmem [resolvable:$true] %s78
      %81 = dma.hbm_to_vmem [thread:$0]  %s12, 16, %s79, [#allocation9]
    $region53: #{cuts_plus_forward.1} parent=1 // pred_fallthru
      _
    // Predicated region
    $region54: #{cuts_plus_forward.1} parent=1 // pred_check
      _
    $region55: #{cuts_plus_forward.1} parent=1 // pred_check_branch
      %83 = sbr.rel (0) target = $region57
    $region56: #{cuts_plus_forward.1} parent=1 // pred_region
      %84 = dma.done [#allocation3], 16
    $region57: #{cuts_plus_forward.1} parent=1 // pred_fallthru
      _
    // Predicated region
    $region58: #{cuts_plus_forward.1} parent=1 // pred_check
      _
    $region59: #{cuts_plus_forward.1} parent=1 // pred_check_branch
      %86 = sbr.rel (0) target = $region61
    $region60: #{cuts_plus_forward.1} parent=1 // pred_region
      %87 = dma.done [#allocation6], 16
    $region61: #{cuts_plus_forward.1} parent=1 // pred_fallthru
      _
    // Predicated region
    $region62: #{cuts_plus_forward.1} parent=1 // pred_check
      _
    $region63: #{cuts_plus_forward.1} parent=1 // pred_check_branch
      %89 = sbr.rel (0) target = $region65
    $region64: #{cuts_plus_forward.1} parent=1 // pred_region
      %90 = dma.done [#allocation6], 256
    $region65: #{cuts_plus_forward.1} parent=1 // pred_fallthru
      _
    // Predicated region
    $region66: #{cuts_plus_forward.1} parent=1 // pred_check
      _
    $region67: #{cuts_plus_forward.1} parent=1 // pred_check_branch
      %92 = sbr.rel (0) target = $region69
    $region68: #{cuts_plus_forward.1} parent=1 // pred_region
      %93 = dma.done [#allocation9], 16
    $region69: #{cuts_plus_forward.1} parent=1 // pred_fallthru
      _
    %v95 = vld [vmem:[%s0] sm:$0xff]
    %v96 = vld [vmem:[%s0 + $0x8] sm:$0xff]
    %v97 = vld [vmem:[%s1] sm:$0xff]
    %v98 = vld [vmem:[%s1 + $0x8] sm:$0xff]
    %v99 = vld [vmem:[%s1 + $0x10] sm:$0xff]
    %v100 = vld [vmem:[%s1 + $0x18] sm:$0xff]
    %v103 = vcombine.high %v95, %v95
    %v105 = vunpack.c.l.s4 1966171168
    %v106 = vunpack.c.0.s8 %v105
    %v107 = vlaneseq
    %v108 = vshrl.u32 %v107, 7
    %v109 = vsub.s32 %v106, %v108
    %v110 = vrot.slane %v95, %v109
    %v112 = vunpack.c.l.s4 1966171168
    %v113 = vunpack.c.0.s8 %v112
    %v114 = vlaneseq
    %v115 = vshrl.u32 %v114, 7
    %v116 = vsub.s32 %v113, %v115
    %v117 = vrot.slane %v103, %v116
    %v118 = vcombine.high %v110, %v110
    %v119 = vcombine.high %v117, %v117
    %v121 = vunpack.c.l.s4 1966171168
    %v122 = vunpack.c.0.s8 %v121
    %v123 = vlaneseq
    %v124 = vshrl.u32 %v123, 7
    %v125 = vsub.s32 %v122, %v124
    %v126 = vrot.slane %v110, %v125
    %v128 = vunpack.c.l.s4 1966171168
    %v129 = vunpack.c.0.s8 %v128
    %v130 = vlaneseq
    %v131 = vshrl.u32 %v130, 7
    %v132 = vsub.s32 %v129, %v131
    %v133 = vrot.slane %v117, %v132
    %v135 = vunpack.c.l.s4 1966171168
    %v136 = vunpack.c.0.s8 %v135
    %v137 = vlaneseq
    %v138 = vshrl.u32 %v137, 7
    %v139 = vsub.s32 %v136, %v138
    %v140 = vrot.slane %v118, %v139
    %v142 = vunpack.c.l.s4 1966171168
    %v143 = vunpack.c.0.s8 %v142
    %v144 = vlaneseq
    %v145 = vshrl.u32 %v144, 7
    %v146 = vsub.s32 %v143, %v145
    %v147 = vrot.slane %v119, %v146
    %v148 = vcombine.high %v126, %v126
    %v149 = vcombine.high %v133, %v133
    %v150 = vcombine.high %v140, %v140
    %v151 = vcombine.high %v147, %v147
    %v152 = vcombine.high %v96, %v96
    %v154 = vunpack.c.l.s4 1966171168
    %v155 = vunpack.c.0.s8 %v154
    %v156 = vlaneseq
    %v157 = vshrl.u32 %v156, 7
    %v158 = vsub.s32 %v155, %v157
    %v159 = vrot.slane %v96, %v158
    %v161 = vunpack.c.l.s4 1966171168
    %v162 = vunpack.c.0.s8 %v161
    %v163 = vlaneseq
    %v164 = vshrl.u32 %v163, 7
    %v165 = vsub.s32 %v162, %v164
    %v166 = vrot.slane %v152, %v165
    %v167 = vcombine.high %v159, %v159
    %v168 = vcombine.high %v166, %v166
    %v170 = vunpack.c.l.s4 1966171168
    %v171 = vunpack.c.0.s8 %v170
    %v172 = vlaneseq
    %v173 = vshrl.u32 %v172, 7
    %v174 = vsub.s32 %v171, %v173
    %v175 = vrot.slane %v159, %v174
    %v177 = vunpack.c.l.s4 1966171168
    %v178 = vunpack.c.0.s8 %v177
    %v179 = vlaneseq
    %v180 = vshrl.u32 %v179, 7
    %v181 = vsub.s32 %v178, %v180
    %v182 = vrot.slane %v166, %v181
    %v184 = vunpack.c.l.s4 1966171168
    %v185 = vunpack.c.0.s8 %v184
    %v186 = vlaneseq
    %v187 = vshrl.u32 %v186, 7
    %v188 = vsub.s32 %v185, %v187
    %v189 = vrot.slane %v167, %v188
    %v191 = vunpack.c.l.s4 1966171168
    %v192 = vunpack.c.0.s8 %v191
    %v193 = vlaneseq
    %v194 = vshrl.u32 %v193, 7
    %v195 = vsub.s32 %v192, %v194
    %v196 = vrot.slane %v168, %v195
    %v197 = vcombine.high %v175, %v175
    %v198 = vcombine.high %v182, %v182
    %v199 = vcombine.high %v189, %v189
    %v200 = vcombine.high %v196, %v196
    %v201 = vlaneseq
    %v202 = vshrl.u32 %v201, 7
    %v203 = vsub.s32 0, %v202
    %v204 = vrot.slane %v126, %v203
    %v205 = vlaneseq
    %v206 = vshrl.u32 %v205, 7
    %v207 = vsub.s32 0, %v206
    %v208 = vrot.slane %v140, %v207
    %v209 = vlaneseq
    %v210 = vshrl.u32 %v209, 7
    %v211 = vsub.s32 0, %v210
    %v212 = vrot.slane %v148, %v211
    %v213 = vlaneseq
    %v214 = vshrl.u32 %v213, 7
    %v215 = vsub.s32 0, %v214
    %v216 = vrot.slane %v150, %v215
    %v217 = vlaneseq
    %v218 = vshrl.u32 %v217, 7
    %v219 = vsub.s32 0, %v218
    %v220 = vrot.slane %v133, %v219
    %v221 = vlaneseq
    %v222 = vshrl.u32 %v221, 7
    %v223 = vsub.s32 0, %v222
    %v224 = vrot.slane %v147, %v223
    %v225 = vlaneseq
    %v226 = vshrl.u32 %v225, 7
    %v227 = vsub.s32 0, %v226
    %v228 = vrot.slane %v149, %v227
    %v229 = vlaneseq
    %v230 = vshrl.u32 %v229, 7
    %v231 = vsub.s32 0, %v230
    %v232 = vrot.slane %v151, %v231
    %v233 = vlaneseq
    %v234 = vshrl.u32 %v233, 7
    %v235 = vsub.s32 0, %v234
    %v236 = vrot.slane %v175, %v235
    %v237 = vlaneseq
    %v238 = vshrl.u32 %v237, 7
    %v239 = vsub.s32 0, %v238
    %v240 = vrot.slane %v189, %v239
    %v241 = vlaneseq
    %v242 = vshrl.u32 %v241, 7
    %v243 = vsub.s32 0, %v242
    %v244 = vrot.slane %v197, %v243
    %v245 = vlaneseq
    %v246 = vshrl.u32 %v245, 7
    %v247 = vsub.s32 0, %v246
    %v248 = vrot.slane %v199, %v247
    %v249 = vlaneseq
    %v250 = vshrl.u32 %v249, 7
    %v251 = vsub.s32 0, %v250
    %v252 = vrot.slane %v182, %v251
    %v253 = vlaneseq
    %v254 = vshrl.u32 %v253, 7
    %v255 = vsub.s32 0, %v254
    %v256 = vrot.slane %v196, %v255
    %v257 = vlaneseq
    %v258 = vshrl.u32 %v257, 7
    %v259 = vsub.s32 0, %v258
    %v260 = vrot.slane %v198, %v259
    %v261 = vlaneseq
    %v262 = vshrl.u32 %v261, 7
    %v263 = vsub.s32 0, %v262
    %v264 = vrot.slane %v200, %v263
    %v281 = vmul.f32 %v204, %v97
    %v282 = vmul.f32 %v204, %v98
    %v283 = vmul.f32 %v208, %v97
    %v284 = vmul.f32 %v208, %v98
    %v285 = vmul.f32 %v212, %v97
    %v286 = vmul.f32 %v212, %v98
    %v287 = vmul.f32 %v216, %v97
    %v288 = vmul.f32 %v216, %v98
    %v289 = vmul.f32 %v220, %v97
    %v290 = vmul.f32 %v220, %v98
    %v291 = vmul.f32 %v224, %v97
    %v292 = vmul.f32 %v224, %v98
    %v293 = vmul.f32 %v228, %v97
    %v294 = vmul.f32 %v228, %v98
    %v295 = vmul.f32 %v232, %v97
    %v296 = vmul.f32 %v232, %v98
    %v297 = vmul.f32 %v236, %v99
    %v298 = vmul.f32 %v236, %v100
    %v299 = vmul.f32 %v240, %v99
    %v300 = vmul.f32 %v240, %v100
    %v301 = vmul.f32 %v244, %v99
    %v302 = vmul.f32 %v244, %v100
    %v303 = vmul.f32 %v248, %v99
    %v304 = vmul.f32 %v248, %v100
    %v305 = vmul.f32 %v252, %v99
    %v306 = vmul.f32 %v252, %v100
    %v307 = vmul.f32 %v256, %v99
    %v308 = vmul.f32 %v256, %v100
    %v309 = vmul.f32 %v260, %v99
    %v310 = vmul.f32 %v260, %v100
    %v311 = vmul.f32 %v264, %v99
    %v312 = vmul.f32 %v264, %v100
    %v313 = vpack.c.bf16 %v282, %v281
    %v314 = vpack.c.bf16 %v284, %v283
    %v315 = vpack.c.bf16 %v286, %v285
    %v316 = vpack.c.bf16 %v288, %v287
    %v317 = vpack.c.bf16 %v290, %v289
    %v318 = vpack.c.bf16 %v292, %v291
    %v319 = vpack.c.bf16 %v294, %v293
    %v320 = vpack.c.bf16 %v296, %v295
    %v321 = vpack.c.bf16 %v298, %v297
    %v322 = vpack.c.bf16 %v300, %v299
    %v323 = vpack.c.bf16 %v302, %v301
    %v324 = vpack.c.bf16 %v304, %v303
    %v325 = vpack.c.bf16 %v306, %v305
    %v326 = vpack.c.bf16 %v308, %v307
    %v327 = vpack.c.bf16 %v310, %v309
    %v328 = vpack.c.bf16 %v312, %v311
    %v329 = vld [vmem:[%s2] sm:$0xf]
    %v330 = vld [vmem:[%s2 + $0x4] sm:$0xf]
    %v331 = vld [vmem:[%s3] sm:$0x1]
    %v333 = vlaneseq
    %v334 = vshrl.u32 %v333, 7
    %v335 = vsub.s32 0, %v334
    %v336 = vrot.slane %v331, %v335
    %v340 = vunpack.c.l.b16 %v329
    %v341 = vunpack.c.l.b16 %v330
    %v342 = vpack.c.b16 %v341, %v340
    %vm344 = vcmask 130048
    %v346 = vsel %vm344, %v313, 0
    %v349 = vsel %vm344, %v314, 0
    %v352 = vsel %vm344, %v315, 0
    %v355 = vsel %vm344, %v316, 0
    %v358 = vsel %vm344, %v317, 0
    %v361 = vsel %vm344, %v318, 0
    %v364 = vsel %vm344, %v319, 0
    %v367 = vsel %vm344, %v320, 0
    %v370 = vsel %vm344, %v321, 0
    %v373 = vsel %vm344, %v322, 0
    %v376 = vsel %vm344, %v323, 0
    %v379 = vsel %vm344, %v324, 0
    %v382 = vsel %vm344, %v325, 0
    %v385 = vsel %vm344, %v326, 0
    %v388 = vsel %vm344, %v327, 0
    %v391 = vsel %vm344, %v328, 0
    %393 = vmatprep.subr.bf16.mxu0 0
    %394 = vmatpush1.bf16.msra.mxu0 %v342
    %395 = vmatprep.subr.bf16.mxu0 0
    %396 = vmatpush1.bf16.msra.mxu0 0
    %397 = vmatprep.subr.bf16.mxu0 0
    %398 = vmatpush1.bf16.msra.mxu0 0
    %399 = vmatprep.subr.bf16.mxu0 0
    %400 = vmatpush1.bf16.msra.mxu0 0
    %401 = vmatprep.subr.bf16.mxu0 0
    %402 = vmatpush1.bf16.msra.mxu0 0
    %403 = vmatprep.subr.bf16.mxu0 0
    %404 = vmatpush1.bf16.msra.mxu0 0
    %405 = vmatprep.subr.bf16.mxu0 0
    %406 = vmatpush1.bf16.msra.mxu0 0
    %407 = vmatprep.subr.bf16.mxu0 0
    %408 = vmatpush1.bf16.msra.mxu0 0
    %409 = vmatprep.subr.bf16.mxu0 0
    %410 = vmatpush1.bf16.msra.mxu0 0
    %411 = vmatprep.subr.bf16.mxu0 0
    %412 = vmatpush1.bf16.msra.mxu0 0
    %413 = vmatprep.subr.bf16.mxu0 0
    %414 = vmatpush1.bf16.msra.mxu0 0
    %415 = vmatprep.subr.bf16.mxu0 0
    %416 = vmatpush1.bf16.msra.mxu0 0
    %417 = vmatprep.subr.bf16.mxu0 0
    %418 = vmatpush1.bf16.msra.mxu0 0
    %419 = vmatprep.subr.bf16.mxu0 0
    %420 = vmatpush1.bf16.msra.mxu0 0
    %421 = vmatprep.subr.bf16.mxu0 0
    %422 = vmatpush1.bf16.msra.mxu0 0
    %423 = vmatprep.subr.bf16.mxu0 0
    %424 = vmatpush1.bf16.msra.mxu0 0
    %425 = vmatprep.mubr.bf16.mxu0 0
    %426 = vmatmul.mubr.bf16.gmra.mrb[0].mxu0 %v346
    %v427 = vpop.f32.mrb[0].mxu0
    %v428 = vadd.f32 %v336, %v427
    %v429 = vpop.f32.mrb[0].mxu0
    %v430 = vpop.f32.mrb[0].mxu0
    %v431 = vadd.f32 %v336, %v430
    %v432 = vpop.f32.mrb[0].mxu0
    %433 = vmatprep.mubr.bf16.mxu0 0
    %434 = vmatmul.mubr.bf16.gmra.mrb[0].mxu0 %v349
    %v435 = vpop.f32.mrb[0].mxu0
    %v436 = vadd.f32 %v336, %v435
    %v437 = vpop.f32.mrb[0].mxu0
    %v438 = vpop.f32.mrb[0].mxu0
    %v439 = vadd.f32 %v336, %v438
    %v440 = vpop.f32.mrb[0].mxu0
    %441 = vmatprep.mubr.bf16.mxu0 0
    %442 = vmatmul.mubr.bf16.gmra.mrb[0].mxu0 %v352
    %v443 = vpop.f32.mrb[0].mxu0
    %v444 = vadd.f32 %v336, %v443
    %v445 = vpop.f32.mrb[0].mxu0
    %v446 = vpop.f32.mrb[0].mxu0
    %v447 = vadd.f32 %v336, %v446
    %v448 = vpop.f32.mrb[0].mxu0
    %449 = vmatprep.mubr.bf16.mxu0 0
    %450 = vmatmul.mubr.bf16.gmra.mrb[0].mxu0 %v355
    %v451 = vpop.f32.mrb[0].mxu0
    %v452 = vadd.f32 %v336, %v451
    %v453 = vpop.f32.mrb[0].mxu0
    %v454 = vpop.f32.mrb[0].mxu0
    %v455 = vadd.f32 %v336, %v454
    %v456 = vpop.f32.mrb[0].mxu0
    %457 = vmatprep.mubr.bf16.mxu0 0
    %458 = vmatmul.mubr.bf16.gmra.mrb[0].mxu0 %v358
    %v459 = vpop.f32.mrb[0].mxu0
    %v460 = vadd.f32 %v336, %v459
    %v461 = vpop.f32.mrb[0].mxu0
    %v462 = vpop.f32.mrb[0].mxu0
    %v463 = vadd.f32 %v336, %v462
    %v464 = vpop.f32.mrb[0].mxu0
    %465 = vmatprep.mubr.bf16.mxu0 0
    %466 = vmatmul.mubr.bf16.gmra.mrb[0].mxu0 %v361
    %v467 = vpop.f32.mrb[0].mxu0
    %v468 = vadd.f32 %v336, %v467
    %v469 = vpop.f32.mrb[0].mxu0
    %v470 = vpop.f32.mrb[0].mxu0
    %v471 = vadd.f32 %v336, %v470
    %v472 = vpop.f32.mrb[0].mxu0
    %473 = vmatprep.mubr.bf16.mxu0 0
    %474 = vmatmul.mubr.bf16.gmra.mrb[0].mxu0 %v364
    %v475 = vpop.f32.mrb[0].mxu0
    %v476 = vadd.f32 %v336, %v475
    %v477 = vpop.f32.mrb[0].mxu0
    %v478 = vpop.f32.mrb[0].mxu0
    %v479 = vadd.f32 %v336, %v478
    %v480 = vpop.f32.mrb[0].mxu0
    %481 = vmatprep.mubr.bf16.mxu0 0
    %482 = vmatmul.mubr.bf16.gmra.mrb[0].mxu0 %v367
    %v483 = vpop.f32.mrb[0].mxu0
    %v484 = vadd.f32 %v336, %v483
    %v485 = vpop.f32.mrb[0].mxu0
    %v486 = vpop.f32.mrb[0].mxu0
    %v487 = vadd.f32 %v336, %v486
    %v488 = vpop.f32.mrb[0].mxu0
    %489 = vmatprep.mubr.bf16.mxu0 0
    %490 = vmatmul.mubr.bf16.gmra.mrb[0].mxu0 %v370
    %v491 = vpop.f32.mrb[0].mxu0
    %v492 = vadd.f32 %v336, %v491
    %v493 = vpop.f32.mrb[0].mxu0
    %v494 = vpop.f32.mrb[0].mxu0
    %v495 = vadd.f32 %v336, %v494
    %v496 = vpop.f32.mrb[0].mxu0
    %497 = vmatprep.mubr.bf16.mxu0 0
    %498 = vmatmul.mubr.bf16.gmra.mrb[0].mxu0 %v373
    %v499 = vpop.f32.mrb[0].mxu0
    %v500 = vadd.f32 %v336, %v499
    %v501 = vpop.f32.mrb[0].mxu0
    %v502 = vpop.f32.mrb[0].mxu0
    %v503 = vadd.f32 %v336, %v502
    %v504 = vpop.f32.mrb[0].mxu0
    %505 = vmatprep.mubr.bf16.mxu0 0
    %506 = vmatmul.mubr.bf16.gmra.mrb[0].mxu0 %v376
    %v507 = vpop.f32.mrb[0].mxu0
    %v508 = vadd.f32 %v336, %v507
    %v509 = vpop.f32.mrb[0].mxu0
    %v510 = vpop.f32.mrb[0].mxu0
    %v511 = vadd.f32 %v336, %v510
    %v512 = vpop.f32.mrb[0].mxu0
    %513 = vmatprep.mubr.bf16.mxu0 0
    %514 = vmatmul.mubr.bf16.gmra.mrb[0].mxu0 %v379
    %v515 = vpop.f32.mrb[0].mxu0
    %v516 = vadd.f32 %v336, %v515
    %v517 = vpop.f32.mrb[0].mxu0
    %v518 = vpop.f32.mrb[0].mxu0
    %v519 = vadd.f32 %v336, %v518
    %v520 = vpop.f32.mrb[0].mxu0
    %521 = vmatprep.mubr.bf16.mxu0 0
    %522 = vmatmul.mubr.bf16.gmra.mrb[0].mxu0 %v382
    %v523 = vpop.f32.mrb[0].mxu0
    %v524 = vadd.f32 %v336, %v523
    %v525 = vpop.f32.mrb[0].mxu0
    %v526 = vpop.f32.mrb[0].mxu0
    %v527 = vadd.f32 %v336, %v526
    %v528 = vpop.f32.mrb[0].mxu0
    %529 = vmatprep.mubr.bf16.mxu0 0
    %530 = vmatmul.mubr.bf16.gmra.mrb[0].mxu0 %v385
    %v531 = vpop.f32.mrb[0].mxu0
    %v532 = vadd.f32 %v336, %v531
    %v533 = vpop.f32.mrb[0].mxu0
    %v534 = vpop.f32.mrb[0].mxu0
    %v535 = vadd.f32 %v336, %v534
    %v536 = vpop.f32.mrb[0].mxu0
    %537 = vmatprep.mubr.bf16.mxu0 0
    %538 = vmatmul.mubr.bf16.gmra.mrb[0].mxu0 %v388
    %v539 = vpop.f32.mrb[0].mxu0
    %v540 = vadd.f32 %v336, %v539
    %v541 = vpop.f32.mrb[0].mxu0
    %v542 = vpop.f32.mrb[0].mxu0
    %v543 = vadd.f32 %v336, %v542
    %v544 = vpop.f32.mrb[0].mxu0
    %545 = vmatprep.mubr.bf16.mxu0 0
    %546 = vmatmul.mubr.bf16.gmra.mrb[0].mxu0 %v391
    %v547 = vpop.f32.mrb[0].mxu0
    %v548 = vadd.f32 %v336, %v547
    %v549 = vpop.f32.mrb[0].mxu0
    %v550 = vpop.f32.mrb[0].mxu0
    %v551 = vadd.f32 %v336, %v550
    %v552 = vpop.f32.mrb[0].mxu0
    %553 = vdwg.mxu0
    %v554 = vxor.u32 %v428, 2147483648
    %v555 = vxor.u32 %v431, 2147483648
    %v556 = vxor.u32 %v436, 2147483648
    %v557 = vxor.u32 %v439, 2147483648
    %v558 = vxor.u32 %v444, 2147483648
    %v559 = vxor.u32 %v447, 2147483648
    %v560 = vxor.u32 %v452, 2147483648
    %v561 = vxor.u32 %v455, 2147483648
    %v562 = vxor.u32 %v460, 2147483648
    %v563 = vxor.u32 %v463, 2147483648
    %v564 = vxor.u32 %v468, 2147483648
    %v565 = vxor.u32 %v471, 2147483648
    %v566 = vxor.u32 %v476, 2147483648
    %v567 = vxor.u32 %v479, 2147483648
    %v568 = vxor.u32 %v484, 2147483648
    %v569 = vxor.u32 %v487, 2147483648
    %v570 = vxor.u32 %v492, 2147483648
    %v571 = vxor.u32 %v495, 2147483648
    %v572 = vxor.u32 %v500, 2147483648
    %v573 = vxor.u32 %v503, 2147483648
    %v574 = vxor.u32 %v508, 2147483648
    %v575 = vxor.u32 %v511, 2147483648
    %v576 = vxor.u32 %v516, 2147483648
    %v577 = vxor.u32 %v519, 2147483648
    %v578 = vxor.u32 %v524, 2147483648
    %v579 = vxor.u32 %v527, 2147483648
    %v580 = vxor.u32 %v532, 2147483648
    %v581 = vxor.u32 %v535, 2147483648
    %v582 = vxor.u32 %v540, 2147483648
    %v583 = vxor.u32 %v543, 2147483648
    %v584 = vxor.u32 %v548, 2147483648
    %v585 = vxor.u32 %v551, 2147483648
    %v586 = vmul.f32 %v554, 1.442695
    %v587 = vpow.pop %v586
    %v588 = vmul.f32 %v555, 1.442695
    %v589 = vpow.pop %v588
    %v590 = vmul.f32 %v556, 1.442695
    %v591 = vpow.pop %v590
    %v592 = vmul.f32 %v557, 1.442695
    %v593 = vpow.pop %v592
    %v594 = vmul.f32 %v558, 1.442695
    %v595 = vpow.pop %v594
    %v596 = vmul.f32 %v559, 1.442695
    %v597 = vpow.pop %v596
    %v598 = vmul.f32 %v560, 1.442695
    %v599 = vpow.pop %v598
    %v600 = vmul.f32 %v561, 1.442695
    %v601 = vpow.pop %v600
    %v602 = vmul.f32 %v562, 1.442695
    %v603 = vpow.pop %v602
    %v604 = vmul.f32 %v563, 1.442695
    %v605 = vpow.pop %v604
    %v606 = vmul.f32 %v564, 1.442695
    %v607 = vpow.pop %v606
    %v608 = vmul.f32 %v565, 1.442695
    %v609 = vpow.pop %v608
    %v610 = vmul.f32 %v566, 1.442695
    %v611 = vpow.pop %v610
    %v612 = vmul.f32 %v567, 1.442695
    %v613 = vpow.pop %v612
    %v614 = vmul.f32 %v568, 1.442695
    %v615 = vpow.pop %v614
    %v616 = vmul.f32 %v569, 1.442695
    %v617 = vpow.pop %v616
    %v618 = vmul.f32 %v570, 1.442695
    %v619 = vpow.pop %v618
    %v620 = vmul.f32 %v571, 1.442695
    %v621 = vpow.pop %v620
    %v622 = vmul.f32 %v572, 1.442695
    %v623 = vpow.pop %v622
    %v624 = vmul.f32 %v573, 1.442695
    %v625 = vpow.pop %v624
    %v626 = vmul.f32 %v574, 1.442695
    %v627 = vpow.pop %v626
    %v628 = vmul.f32 %v575, 1.442695
    %v629 = vpow.pop %v628
    %v630 = vmul.f32 %v576, 1.442695
    %v631 = vpow.pop %v630
    %v632 = vmul.f32 %v577, 1.442695
    %v633 = vpow.pop %v632
    %v634 = vmul.f32 %v578, 1.442695
    %v635 = vpow.pop %v634
    %v636 = vmul.f32 %v579, 1.442695
    %v637 = vpow.pop %v636
    %v638 = vmul.f32 %v580, 1.442695
    %v639 = vpow.pop %v638
    %v640 = vmul.f32 %v581, 1.442695
    %v641 = vpow.pop %v640
    %v642 = vmul.f32 %v582, 1.442695
    %v643 = vpow.pop %v642
    %v644 = vmul.f32 %v583, 1.442695
    %v645 = vpow.pop %v644
    %v646 = vmul.f32 %v584, 1.442695
    %v647 = vpow.pop %v646
    %v648 = vmul.f32 %v585, 1.442695
    %v649 = vpow.pop %v648
    %v650 = vadd.f32 %v587, 1.0
    %v651 = vadd.f32 %v589, 1.0
    %v652 = vadd.f32 %v591, 1.0
    %v653 = vadd.f32 %v593, 1.0
    %v654 = vadd.f32 %v595, 1.0
    %v655 = vadd.f32 %v597, 1.0
    %v656 = vadd.f32 %v599, 1.0
    %v657 = vadd.f32 %v601, 1.0
    %v658 = vadd.f32 %v603, 1.0
    %v659 = vadd.f32 %v605, 1.0
    %v660 = vadd.f32 %v607, 1.0
    %v661 = vadd.f32 %v609, 1.0
    %v662 = vadd.f32 %v611, 1.0
    %v663 = vadd.f32 %v613, 1.0
    %v664 = vadd.f32 %v615, 1.0
    %v665 = vadd.f32 %v617, 1.0
    %v666 = vadd.f32 %v619, 1.0
    %v667 = vadd.f32 %v621, 1.0
    %v668 = vadd.f32 %v623, 1.0
    %v669 = vadd.f32 %v625, 1.0
    %v670 = vadd.f32 %v627, 1.0
    %v671 = vadd.f32 %v629, 1.0
    %v672 = vadd.f32 %v631, 1.0
    %v673 = vadd.f32 %v633, 1.0
    %v674 = vadd.f32 %v635, 1.0
    %v675 = vadd.f32 %v637, 1.0
    %v676 = vadd.f32 %v639, 1.0
    %v677 = vadd.f32 %v641, 1.0
    %v678 = vadd.f32 %v643, 1.0
    %v679 = vadd.f32 %v645, 1.0
    %v680 = vadd.f32 %v647, 1.0
    %v681 = vadd.f32 %v649, 1.0
    %v682 = vrcp.pop %v650
    %v683 = vmul.f32 1.0, %v682
    %v684 = vrcp.pop %v651
    %v685 = vmul.f32 1.0, %v684
    %v686 = vrcp.pop %v652
    %v687 = vmul.f32 1.0, %v686
    %v688 = vrcp.pop %v653
    %v689 = vmul.f32 1.0, %v688
    %v690 = vrcp.pop %v654
    %v691 = vmul.f32 1.0, %v690
    %v692 = vrcp.pop %v655
    %v693 = vmul.f32 1.0, %v692
    %v694 = vrcp.pop %v656
    %v695 = vmul.f32 1.0, %v694
    %v696 = vrcp.pop %v657
    %v697 = vmul.f32 1.0, %v696
    %v698 = vrcp.pop %v658
    %v699 = vmul.f32 1.0, %v698
    %v700 = vrcp.pop %v659
    %v701 = vmul.f32 1.0, %v700
    %v702 = vrcp.pop %v660
    %v703 = vmul.f32 1.0, %v702
    %v704 = vrcp.pop %v661
    %v705 = vmul.f32 1.0, %v704
    %v706 = vrcp.pop %v662
    %v707 = vmul.f32 1.0, %v706
    %v708 = vrcp.pop %v663
    %v709 = vmul.f32 1.0, %v708
    %v710 = vrcp.pop %v664
    %v711 = vmul.f32 1.0, %v710
    %v712 = vrcp.pop %v665
    %v713 = vmul.f32 1.0, %v712
    %v714 = vrcp.pop %v666
    %v715 = vmul.f32 1.0, %v714
    %v716 = vrcp.pop %v667
    %v717 = vmul.f32 1.0, %v716
    %v718 = vrcp.pop %v668
    %v719 = vmul.f32 1.0, %v718
    %v720 = vrcp.pop %v669
    %v721 = vmul.f32 1.0, %v720
    %v722 = vrcp.pop %v670
    %v723 = vmul.f32 1.0, %v722
    %v724 = vrcp.pop %v671
    %v725 = vmul.f32 1.0, %v724
    %v726 = vrcp.pop %v672
    %v727 = vmul.f32 1.0, %v726
    %v728 = vrcp.pop %v673
    %v729 = vmul.f32 1.0, %v728
    %v730 = vrcp.pop %v674
    %v731 = vmul.f32 1.0, %v730
    %v732 = vrcp.pop %v675
    %v733 = vmul.f32 1.0, %v732
    %v734 = vrcp.pop %v676
    %v735 = vmul.f32 1.0, %v734
    %v736 = vrcp.pop %v677
    %v737 = vmul.f32 1.0, %v736
    %v738 = vrcp.pop %v678
    %v739 = vmul.f32 1.0, %v738
    %v740 = vrcp.pop %v679
    %v741 = vmul.f32 1.0, %v740
    %v742 = vrcp.pop %v680
    %v743 = vmul.f32 1.0, %v742
    %v744 = vrcp.pop %v681
    %v745 = vmul.f32 1.0, %v744
    %v746 = vtanh.pop %v428
    %v747 = vtanh.pop %v431
    %v748 = vtanh.pop %v436
    %v749 = vtanh.pop %v439
    %v750 = vtanh.pop %v444
    %v751 = vtanh.pop %v447
    %v752 = vtanh.pop %v452
    %v753 = vtanh.pop %v455
    %v754 = vtanh.pop %v460
    %v755 = vtanh.pop %v463
    %v756 = vtanh.pop %v468
    %v757 = vtanh.pop %v471
    %v758 = vtanh.pop %v476
    %v759 = vtanh.pop %v479
    %v760 = vtanh.pop %v484
    %v761 = vtanh.pop %v487
    %v762 = vtanh.pop %v492
    %v763 = vtanh.pop %v495
    %v764 = vtanh.pop %v500
    %v765 = vtanh.pop %v503
    %v766 = vtanh.pop %v508
    %v767 = vtanh.pop %v511
    %v768 = vtanh.pop %v516
    %v769 = vtanh.pop %v519
    %v770 = vtanh.pop %v524
    %v771 = vtanh.pop %v527
    %v772 = vtanh.pop %v532
    %v773 = vtanh.pop %v535
    %v774 = vtanh.pop %v540
    %v775 = vtanh.pop %v543
    %v776 = vtanh.pop %v548
    %v777 = vtanh.pop %v551
    %v778 = vld [vmem:[%s4] sm:$0xff]
    %v779 = vld [vmem:[%s4 + $0x8] sm:$0xff]
    %v780 = vmul.f32 %v683, %v778
    %v781 = vmul.f32 %v685, %v779
    %v782 = vmul.f32 %v715, %v778
    %v783 = vmul.f32 %v717, %v779
    %v784 = vsub.f32 1.0, %v683
    %v785 = vsub.f32 1.0, %v685
    %v786 = vsub.f32 1.0, %v715
    %v787 = vsub.f32 1.0, %v717
    %792 = vrot.lane.b32.xlu0 %v746, 96
    %v793 = vpop.permute.xlu0 %792
    %794 = vrot.lane.b32.xlu0 %v747, 96
    %v795 = vpop.permute.xlu0 %794
    %796 = vrot.lane.b32.xlu0 %v762, 96
    %v797 = vpop.permute.xlu0 %796
    %798 = vrot.lane.b32.xlu0 %v763, 96
    %v799 = vpop.permute.xlu0 %798
    %v804 = vmul.f32 %v784, %v793
    %v805 = vmul.f32 %v785, %v795
    %v806 = vmul.f32 %v786, %v797
    %v807 = vmul.f32 %v787, %v799
    %v808 = vadd.f32 %v780, %v804
    %v809 = vadd.f32 %v781, %v805
    %v810 = vadd.f32 %v782, %v806
    %v811 = vadd.f32 %v783, %v807
    %v812 = vmul.f32 %v687, %v808
    %v813 = vmul.f32 %v689, %v809
    %v814 = vmul.f32 %v719, %v810
    %v815 = vmul.f32 %v721, %v811
    %v816 = vsub.f32 1.0, %v687
    %v817 = vsub.f32 1.0, %v689
    %v818 = vsub.f32 1.0, %v719
    %v819 = vsub.f32 1.0, %v721
    %824 = vrot.lane.b32.xlu0 %v748, 96
    %v825 = vpop.permute.xlu0 %824
    %826 = vrot.lane.b32.xlu0 %v749, 96
    %v827 = vpop.permute.xlu0 %826
    %828 = vrot.lane.b32.xlu0 %v764, 96
    %v829 = vpop.permute.xlu0 %828
    %830 = vrot.lane.b32.xlu0 %v765, 96
    %v831 = vpop.permute.xlu0 %830
    %v836 = vmul.f32 %v816, %v825
    %v837 = vmul.f32 %v817, %v827
    %v838 = vmul.f32 %v818, %v829
    %v839 = vmul.f32 %v819, %v831
    %v840 = vadd.f32 %v812, %v836
    %v841 = vadd.f32 %v813, %v837
    %v842 = vadd.f32 %v814, %v838
    %v843 = vadd.f32 %v815, %v839
    %v844 = vmul.f32 %v691, %v840
    %v845 = vmul.f32 %v693, %v841
    %v846 = vmul.f32 %v723, %v842
    %v847 = vmul.f32 %v725, %v843
    %v848 = vsub.f32 1.0, %v691
    %v849 = vsub.f32 1.0, %v693
    %v850 = vsub.f32 1.0, %v723
    %v851 = vsub.f32 1.0, %v725
    %856 = vrot.lane.b32.xlu0 %v750, 96
    %v857 = vpop.permute.xlu0 %856
    %858 = vrot.lane.b32.xlu0 %v751, 96
    %v859 = vpop.permute.xlu0 %858
    %860 = vrot.lane.b32.xlu0 %v766, 96
    %v861 = vpop.permute.xlu0 %860
    %862 = vrot.lane.b32.xlu0 %v767, 96
    %v863 = vpop.permute.xlu0 %862
    %v868 = vmul.f32 %v848, %v857
    %v869 = vmul.f32 %v849, %v859
    %v870 = vmul.f32 %v850, %v861
    %v871 = vmul.f32 %v851, %v863
    %v872 = vadd.f32 %v844, %v868
    %v873 = vadd.f32 %v845, %v869
    %v874 = vadd.f32 %v846, %v870
    %v875 = vadd.f32 %v847, %v871
    %v876 = vmul.f32 %v695, %v872
    %v877 = vmul.f32 %v697, %v873
    %v878 = vmul.f32 %v727, %v874
    %v879 = vmul.f32 %v729, %v875
    %v880 = vsub.f32 1.0, %v695
    %v881 = vsub.f32 1.0, %v697
    %v882 = vsub.f32 1.0, %v727
    %v883 = vsub.f32 1.0, %v729
    %888 = vrot.lane.b32.xlu0 %v752, 96
    %v889 = vpop.permute.xlu0 %888
    %890 = vrot.lane.b32.xlu0 %v753, 96
    %v891 = vpop.permute.xlu0 %890
    %892 = vrot.lane.b32.xlu0 %v768, 96
    %v893 = vpop.permute.xlu0 %892
    %894 = vrot.lane.b32.xlu0 %v769, 96
    %v895 = vpop.permute.xlu0 %894
    %v900 = vmul.f32 %v880, %v889
    %v901 = vmul.f32 %v881, %v891
    %v902 = vmul.f32 %v882, %v893
    %v903 = vmul.f32 %v883, %v895
    %v904 = vadd.f32 %v876, %v900
    %v905 = vadd.f32 %v877, %v901
    %v906 = vadd.f32 %v878, %v902
    %v907 = vadd.f32 %v879, %v903
    %v908 = vmul.f32 %v699, %v904
    %v909 = vmul.f32 %v701, %v905
    %v910 = vmul.f32 %v731, %v906
    %v911 = vmul.f32 %v733, %v907
    %v912 = vsub.f32 1.0, %v699
    %v913 = vsub.f32 1.0, %v701
    %v914 = vsub.f32 1.0, %v731
    %v915 = vsub.f32 1.0, %v733
    %920 = vrot.lane.b32.xlu0 %v754, 96
    %v921 = vpop.permute.xlu0 %920
    %922 = vrot.lane.b32.xlu0 %v755, 96
    %v923 = vpop.permute.xlu0 %922
    %924 = vrot.lane.b32.xlu0 %v770, 96
    %v925 = vpop.permute.xlu0 %924
    %926 = vrot.lane.b32.xlu0 %v771, 96
    %v927 = vpop.permute.xlu0 %926
    %v932 = vmul.f32 %v912, %v921
    %v933 = vmul.f32 %v913, %v923
    %v934 = vmul.f32 %v914, %v925
    %v935 = vmul.f32 %v915, %v927
    %v936 = vadd.f32 %v908, %v932
    %v937 = vadd.f32 %v909, %v933
    %v938 = vadd.f32 %v910, %v934
    %v939 = vadd.f32 %v911, %v935
    %v940 = vmul.f32 %v703, %v936
    %v941 = vmul.f32 %v705, %v937
    %v942 = vmul.f32 %v735, %v938
    %v943 = vmul.f32 %v737, %v939
    %v944 = vsub.f32 1.0, %v703
    %v945 = vsub.f32 1.0, %v705
    %v946 = vsub.f32 1.0, %v735
    %v947 = vsub.f32 1.0, %v737
    %952 = vrot.lane.b32.xlu0 %v756, 96
    %v953 = vpop.permute.xlu0 %952
    %954 = vrot.lane.b32.xlu0 %v757, 96
    %v955 = vpop.permute.xlu0 %954
    %956 = vrot.lane.b32.xlu0 %v772, 96
    %v957 = vpop.permute.xlu0 %956
    %958 = vrot.lane.b32.xlu0 %v773, 96
    %v959 = vpop.permute.xlu0 %958
    %v964 = vmul.f32 %v944, %v953
    %v965 = vmul.f32 %v945, %v955
    %v966 = vmul.f32 %v946, %v957
    %v967 = vmul.f32 %v947, %v959
    %v968 = vadd.f32 %v940, %v964
    %v969 = vadd.f32 %v941, %v965
    %v970 = vadd.f32 %v942, %v966
    %v971 = vadd.f32 %v943, %v967
    %v972 = vmul.f32 %v707, %v968
    %v973 = vmul.f32 %v709, %v969
    %v974 = vmul.f32 %v739, %v970
    %v975 = vmul.f32 %v741, %v971
    %v976 = vsub.f32 1.0, %v707
    %v977 = vsub.f32 1.0, %v709
    %v978 = vsub.f32 1.0, %v739
    %v979 = vsub.f32 1.0, %v741
    %984 = vrot.lane.b32.xlu0 %v758, 96
    %v985 = vpop.permute.xlu0 %984
    %986 = vrot.lane.b32.xlu0 %v759, 96
    %v987 = vpop.permute.xlu0 %986
    %988 = vrot.lane.b32.xlu0 %v774, 96
    %v989 = vpop.permute.xlu0 %988
    %990 = vrot.lane.b32.xlu0 %v775, 96
    %v991 = vpop.permute.xlu0 %990
    %v996 = vmul.f32 %v976, %v985
    %v997 = vmul.f32 %v977, %v987
    %v998 = vmul.f32 %v978, %v989
    %v999 = vmul.f32 %v979, %v991
    %v1000 = vadd.f32 %v972, %v996
    %v1001 = vadd.f32 %v973, %v997
    %v1002 = vadd.f32 %v974, %v998
    %v1003 = vadd.f32 %v975, %v999
    %v1004 = vmul.f32 %v711, %v1000
    %v1005 = vmul.f32 %v713, %v1001
    %v1006 = vmul.f32 %v743, %v1002
    %v1007 = vmul.f32 %v745, %v1003
    %v1008 = vsub.f32 1.0, %v711
    %v1009 = vsub.f32 1.0, %v713
    %v1010 = vsub.f32 1.0, %v743
    %v1011 = vsub.f32 1.0, %v745
    %1016 = vrot.lane.b32.xlu0 %v760, 96
    %v1017 = vpop.permute.xlu0 %1016
    %1018 = vrot.lane.b32.xlu0 %v761, 96
    %v1019 = vpop.permute.xlu0 %1018
    %1020 = vrot.lane.b32.xlu0 %v776, 96
    %v1021 = vpop.permute.xlu0 %1020
    %1022 = vrot.lane.b32.xlu0 %v777, 96
    %v1023 = vpop.permute.xlu0 %1022
    %v1028 = vmul.f32 %v1008, %v1017
    %v1029 = vmul.f32 %v1009, %v1019
    %v1030 = vmul.f32 %v1010, %v1021
    %v1031 = vmul.f32 %v1011, %v1023
    %v1032 = vadd.f32 %v1004, %v1028
    %v1033 = vadd.f32 %v1005, %v1029
    %v1034 = vadd.f32 %v1006, %v1030
    %v1035 = vadd.f32 %v1007, %v1031
    %v1036 = vpack.c.bf16 %v1033, %v1032
    %v1037 = vpack.c.bf16 %v1035, %v1034
    %v1038 = vld [vmem:[%s5] sm:$0xf]
    %v1039 = vld [vmem:[%s5 + $0x4] sm:$0xf]
    %v1040 = vld [vmem:[%s5 + $0x8] sm:$0xf]
    %v1041 = vld [vmem:[%s5 + $0xc] sm:$0xf]
    %v1042 = vld [vmem:[#allocation2] sm:$0x1]
    %v1044 = vlaneseq
    %v1045 = vshrl.u32 %v1044, 7
    %v1046 = vsub.s32 0, %v1045
    %v1047 = vrot.slane %v1042, %v1046
    %v1053 = vunpack.c.l.b16 %v1038
    %v1054 = vunpack.c.l.b16 %v1039
    %v1055 = vunpack.c.l.b16 %v1040
    %v1056 = vunpack.c.l.b16 %v1041
    %v1057 = vpack.c.b16 %v1054, %v1053
    %v1058 = vpack.c.b16 %v1056, %v1055
    %vm1061 = vcmask 261120
    %v1063 = vsel %vm1061, %v1036, 0
    %v1066 = vsel %vm1061, %v1037, 0
    %1068 = vmatprep.subr.bf16.mxu0 0
    %1069 = vmatpush1.bf16.msra.mxu0 %v1057
    %1070 = vmatprep.subr.bf16.mxu0 0
    %1071 = vmatpush1.bf16.msra.mxu0 %v1058
    %1072 = vmatprep.subr.bf16.mxu0 0
    %1073 = vmatpush1.bf16.msra.mxu0 0
    %1074 = vmatprep.subr.bf16.mxu0 0
    %1075 = vmatpush1.bf16.msra.mxu0 0
    %1076 = vmatprep.subr.bf16.mxu0 0
    %1077 = vmatpush1.bf16.msra.mxu0 0
    %1078 = vmatprep.subr.bf16.mxu0 0
    %1079 = vmatpush1.bf16.msra.mxu0 0
    %1080 = vmatprep.subr.bf16.mxu0 0
    %1081 = vmatpush1.bf16.msra.mxu0 0
    %1082 = vmatprep.subr.bf16.mxu0 0
    %1083 = vmatpush1.bf16.msra.mxu0 0
    %1084 = vmatprep.subr.bf16.mxu0 0
    %1085 = vmatpush1.bf16.msra.mxu0 0
    %1086 = vmatprep.subr.bf16.mxu0 0
    %1087 = vmatpush1.bf16.msra.mxu0 0
    %1088 = vmatprep.subr.bf16.mxu0 0
    %1089 = vmatpush1.bf16.msra.mxu0 0
    %1090 = vmatprep.subr.bf16.mxu0 0
    %1091 = vmatpush1.bf16.msra.mxu0 0
    %1092 = vmatprep.subr.bf16.mxu0 0
    %1093 = vmatpush1.bf16.msra.mxu0 0
    %1094 = vmatprep.subr.bf16.mxu0 0
    %1095 = vmatpush1.bf16.msra.mxu0 0
    %1096 = vmatprep.subr.bf16.mxu0 0
    %1097 = vmatpush1.bf16.msra.mxu0 0
    %1098 = vmatprep.subr.bf16.mxu0 0
    %1099 = vmatpush1.bf16.msra.mxu0 0
    %1100 = vmatprep.mubr.bf16.mxu0 0
    %1101 = vmatmul.mubr.bf16.gmra.mrb[0].mxu0 %v1063
    %v1102 = vpop.f32.mrb[0].mxu0
    %v1103 = vadd.f32 %v1047, %v1102
    %v1104 = vpop.f32.mrb[0].mxu0
    %v1105 = vpop.f32.mrb[0].mxu0
    %v1106 = vadd.f32 %v1047, %v1105
    %v1107 = vpop.f32.mrb[0].mxu0
    %1108 = vmatprep.mubr.bf16.mxu0 0
    %1109 = vmatmul.mubr.bf16.gmra.mrb[0].mxu0 %v1066
    %v1110 = vpop.f32.mrb[0].mxu0
    %v1111 = vadd.f32 %v1047, %v1110
    %v1112 = vpop.f32.mrb[0].mxu0
    %v1113 = vpop.f32.mrb[0].mxu0
    %v1114 = vadd.f32 %v1047, %v1113
    %v1115 = vpop.f32.mrb[0].mxu0
    %1116 = vdwg.mxu0
    %vm1117 = vcmp.ge.f32.partialorder %v1103, 0.0
    %vm1118 = vcmp.ge.f32.partialorder %v1106, 0.0
    %vm1119 = vcmp.ge.f32.partialorder %v1111, 0.0
    %vm1120 = vcmp.ge.f32.partialorder %v1114, 0.0
    %v1121 = vmul.f32 %v1103, 0.01
    %v1122 = vmul.f32 %v1106, 0.01
    %v1123 = vmul.f32 %v1111, 0.01
    %v1124 = vmul.f32 %v1114, 0.01
    %v1125 = vsel %vm1117, %v1103, %v1121
    %v1126 = vsel %vm1118, %v1106, %v1122
    %v1127 = vsel %vm1119, %v1111, %v1123
    %v1128 = vsel %vm1120, %v1114, %v1124
    %v1129 = vpack.c.bf16 %v1126, %v1125
    %v1130 = vpack.c.bf16 %v1128, %v1127
    %v1131 = vld [vmem:[%s7] sm:$0xf]
    %v1132 = vld [vmem:[%s7 + $0x4] sm:$0xf]
    %v1133 = vld [vmem:[%s7 + $0x8] sm:$0xf]
    %v1134 = vld [vmem:[%s7 + $0xc] sm:$0xf]
    %v1135 = vld [vmem:[%s8] sm:$0xf]
    %v1136 = vld [vmem:[%s8 + $0x4] sm:$0xf]
    %v1137 = vld [vmem:[%s8 + $0x8] sm:$0xf]
    %v1138 = vld [vmem:[%s8 + $0xc] sm:$0xf]
    %v1143 = vunpack.c.l.b16 %v1135
    %v1144 = vunpack.c.l.b16 %v1136
    %v1145 = vunpack.c.l.b16 %v1137
    %v1146 = vunpack.c.l.b16 %v1138
    %v1147 = vpack.c.b16 %v1144, %v1143
    %v1148 = vpack.c.b16 %v1146, %v1145
    %1151 = vmatprep.subr.bf16.mxu0 0
    %1152 = vmatpush1.bf16.msra.mxu0 %v1147
    %1153 = vmatprep.subr.bf16.mxu0 0
    %1154 = vmatpush1.bf16.msra.mxu0 %v1148
    %1155 = vmatprep.subr.bf16.mxu0 0
    %1156 = vmatpush1.bf16.msra.mxu0 0
    %1157 = vmatprep.subr.bf16.mxu0 0
    %1158 = vmatpush1.bf16.msra.mxu0 0
    %1159 = vmatprep.subr.bf16.mxu0 0
    %1160 = vmatpush1.bf16.msra.mxu0 0
    %1161 = vmatprep.subr.bf16.mxu0 0
    %1162 = vmatpush1.bf16.msra.mxu0 0
    %1163 = vmatprep.subr.bf16.mxu0 0
    %1164 = vmatpush1.bf16.msra.mxu0 0
    %1165 = vmatprep.subr.bf16.mxu0 0
    %1166 = vmatpush1.bf16.msra.mxu0 0
    %1167 = vmatprep.subr.bf16.mxu0 0
    %1168 = vmatpush1.bf16.msra.mxu0 0
    %1169 = vmatprep.subr.bf16.mxu0 0
    %1170 = vmatpush1.bf16.msra.mxu0 0
    %1171 = vmatprep.subr.bf16.mxu0 0
    %1172 = vmatpush1.bf16.msra.mxu0 0
    %1173 = vmatprep.subr.bf16.mxu0 0
    %1174 = vmatpush1.bf16.msra.mxu0 0
    %1175 = vmatprep.subr.bf16.mxu0 0
    %1176 = vmatpush1.bf16.msra.mxu0 0
    %1177 = vmatprep.subr.bf16.mxu0 0
    %1178 = vmatpush1.bf16.msra.mxu0 0
    %1179 = vmatprep.subr.bf16.mxu0 0
    %1180 = vmatpush1.bf16.msra.mxu0 0
    %1181 = vmatprep.subr.bf16.mxu0 0
    %1182 = vmatpush1.bf16.msra.mxu0 0
    %1183 = vmatprep.mubr.bf16.mxu0 0
    %1184 = vmatmul.mubr.bf16.gmra.mrb[0].mxu0 %v1063
    %v1185 = vpop.f32.mrb[0].mxu0
    %v1186 = vadd.f32 0.0, %v1185
    %v1187 = vpop.f32.mrb[0].mxu0
    %v1188 = vpop.f32.mrb[0].mxu0
    %v1189 = vadd.f32 0.0, %v1188
    %v1190 = vpop.f32.mrb[0].mxu0
    %1191 = vmatprep.mubr.bf16.mxu0 0
    %1192 = vmatmul.mubr.bf16.gmra.mrb[0].mxu0 %v1066
    %v1193 = vpop.f32.mrb[0].mxu0
    %v1194 = vadd.f32 0.0, %v1193
    %v1195 = vpop.f32.mrb[0].mxu0
    %v1196 = vpop.f32.mrb[0].mxu0
    %v1197 = vadd.f32 0.0, %v1196
    %v1198 = vpop.f32.mrb[0].mxu0
    %1199 = vdwg.mxu0
    %v1204 = vunpack.c.l.b16 %v1131
    %v1205 = vunpack.c.l.b16 %v1132
    %v1206 = vunpack.c.l.b16 %v1133
    %v1207 = vunpack.c.l.b16 %v1134
    %v1208 = vpack.c.b16 %v1205, %v1204
    %v1209 = vpack.c.b16 %v1207, %v1206
    %v1213 = vsel %vm1061, %v1129, 0
    %v1216 = vsel %vm1061, %v1130, 0
    %1218 = vmatprep.subr.bf16.mxu0 0
    %1219 = vmatpush1.bf16.msra.mxu0 %v1208
    %1220 = vmatprep.subr.bf16.mxu0 0
    %1221 = vmatpush1.bf16.msra.mxu0 %v1209
    %1222 = vmatprep.subr.bf16.mxu0 0
    %1223 = vmatpush1.bf16.msra.mxu0 0
    %1224 = vmatprep.subr.bf16.mxu0 0
    %1225 = vmatpush1.bf16.msra.mxu0 0
    %1226 = vmatprep.subr.bf16.mxu0 0
    %1227 = vmatpush1.bf16.msra.mxu0 0
    %1228 = vmatprep.subr.bf16.mxu0 0
    %1229 = vmatpush1.bf16.msra.mxu0 0
    %1230 = vmatprep.subr.bf16.mxu0 0
    %1231 = vmatpush1.bf16.msra.mxu0 0
    %1232 = vmatprep.subr.bf16.mxu0 0
    %1233 = vmatpush1.bf16.msra.mxu0 0
    %1234 = vmatprep.subr.bf16.mxu0 0
    %1235 = vmatpush1.bf16.msra.mxu0 0
    %1236 = vmatprep.subr.bf16.mxu0 0
    %1237 = vmatpush1.bf16.msra.mxu0 0
    %1238 = vmatprep.subr.bf16.mxu0 0
    %1239 = vmatpush1.bf16.msra.mxu0 0
    %1240 = vmatprep.subr.bf16.mxu0 0
    %1241 = vmatpush1.bf16.msra.mxu0 0
    %1242 = vmatprep.subr.bf16.mxu0 0
    %1243 = vmatpush1.bf16.msra.mxu0 0
    %1244 = vmatprep.subr.bf16.mxu0 0
    %1245 = vmatpush1.bf16.msra.mxu0 0
    %1246 = vmatprep.subr.bf16.mxu0 0
    %1247 = vmatpush1.bf16.msra.mxu0 0
    %1248 = vmatprep.subr.bf16.mxu0 0
    %1249 = vmatpush1.bf16.msra.mxu0 0
    %1250 = vmatprep.mubr.bf16.mxu0 0
    %1251 = vmatmul.mubr.bf16.gmra.mrb[0].mxu0 %v1213
    %v1252 = vpop.f32.mrb[0].mxu0
    %v1253 = vadd.f32 %v1186, %v1252
    %v1254 = vpop.f32.mrb[0].mxu0
    %v1255 = vpop.f32.mrb[0].mxu0
    %v1256 = vadd.f32 %v1189, %v1255
    %v1257 = vpop.f32.mrb[0].mxu0
    %1258 = vmatprep.mubr.bf16.mxu0 0
    %1259 = vmatmul.mubr.bf16.gmra.mrb[0].mxu0 %v1216
    %v1260 = vpop.f32.mrb[0].mxu0
    %v1261 = vadd.f32 %v1194, %v1260
    %v1262 = vpop.f32.mrb[0].mxu0
    %v1263 = vpop.f32.mrb[0].mxu0
    %v1264 = vadd.f32 %v1197, %v1263
    %v1265 = vpop.f32.mrb[0].mxu0
    %1266 = vdwg.mxu0
    %v1267 = vld [vmem:[#allocation5] sm:$0x1]
    %v1269 = vlaneseq
    %v1270 = vshrl.u32 %v1269, 7
    %v1271 = vsub.s32 0, %v1270
    %v1272 = vrot.slane %v1267, %v1271
    %v1274 = vadd.f32 %v1253, %v1272
    %v1275 = vadd.f32 %v1256, %v1272
    %v1276 = vadd.f32 %v1261, %v1272
    %v1277 = vadd.f32 %v1264, %v1272
    %vm1278 = vcmp.ge.f32.partialorder %v1274, 0.0
    %vm1279 = vcmp.ge.f32.partialorder %v1275, 0.0
    %vm1280 = vcmp.ge.f32.partialorder %v1276, 0.0
    %vm1281 = vcmp.ge.f32.partialorder %v1277, 0.0
    %v1282 = vmul.f32 %v1274, 0.01
    %v1283 = vmul.f32 %v1275, 0.01
    %v1284 = vmul.f32 %v1276, 0.01
    %v1285 = vmul.f32 %v1277, 0.01
    %v1286 = vsel %vm1278, %v1274, %v1282
    %v1287 = vsel %vm1279, %v1275, %v1283
    %v1288 = vsel %vm1280, %v1276, %v1284
    %v1289 = vsel %vm1281, %v1277, %v1285
    %v1290 = vld [vmem:[%s10] sm:$0xff]
    %v1291 = vld [vmem:[%s10 + $0x8] sm:$0xff]
    %v1292 = vmul.f32 %v1286, %v1290
    %v1293 = vmul.f32 %v1287, %v1291
    %v1294 = vmul.f32 %v1288, %v1290
    %v1295 = vmul.f32 %v1289, %v1291
    %v1296 = vld [vmem:[#allocation7] sm:$0xff]
    %v1297 = vld [vmem:[#allocation7 + $0x8] sm:$0xff]
    %v1298 = vmul.f32 %v1032, %v1296
    %v1299 = vmul.f32 %v1033, %v1297
    %v1300 = vmul.f32 %v1034, %v1296
    %v1301 = vmul.f32 %v1035, %v1297
    %v1302 = vadd.f32 %v1292, %v1298
    %v1303 = vadd.f32 %v1293, %v1299
    %v1304 = vadd.f32 %v1294, %v1300
    %v1305 = vadd.f32 %v1295, %v1301
    %v1306 = vsel %vm1061, %v1302, 0.0
    %1307 = vadd.xlane.f32.xlu0 %v1306
    %v1308 = vpop.xlane.xlu0 %1307
    %v1309 = vsel %vm1061, %v1303, 0.0
    %1310 = vadd.xlane.f32.xlu0 %v1309
    %v1311 = vpop.xlane.xlu0 %1310
    %v1312 = vsel %vm1061, %v1304, 0.0
    %1313 = vadd.xlane.f32.xlu0 %v1312
    %v1314 = vpop.xlane.xlu0 %1313
    %v1315 = vsel %vm1061, %v1305, 0.0
    %1316 = vadd.xlane.f32.xlu0 %v1315
    %v1317 = vpop.xlane.xlu0 %1316
    %v1318 = vld [vmem:[#allocation8] sm:$0x1]
    %v1320 = vlaneseq
    %v1321 = vshrl.u32 %v1320, 7
    %v1322 = vsub.s32 0, %v1321
    %v1323 = vrot.slane %v1318, %v1322
    %1325 = vbcast.lane.b32.xlu0 %v1323, 256
    %v1326 = vpop.permute.xlu0 %1325
    %s1328 = sor.u32 256, 8
    %1329 = vbcast.lane.b32.xlu0 %v1323, %s1328
    %v1330 = vpop.permute.xlu0 %1329
    %v1333 = vadd.f32 %v1308, %v1326
    %v1334 = vadd.f32 %v1311, %v1330
    %v1335 = vadd.f32 %v1314, %v1326
    %v1336 = vadd.f32 %v1317, %v1330
    %1341 = vset.pattern.permute.xlu0 0
    %1342 = vperm.xlu0 %1341, %v1333
    %v1343 = vpop.permute.xlu0 %1342
    %1344 = vset.pattern.permute.xlu0 0
    %1345 = vperm.xlu0 %1344, %v1334
    %v1346 = vpop.permute.xlu0 %1345
    %1347 = vset.pattern.permute.xlu0 0
    %1348 = vperm.xlu0 %1347, %v1335
    %v1349 = vpop.permute.xlu0 %1348
    %1350 = vset.pattern.permute.xlu0 0
    %1351 = vperm.xlu0 %1350, %v1336
    %v1352 = vpop.permute.xlu0 %1351
    %v1353 = vlaneseq
    %v1354 = vand.u32 %v1353, 127
    %v1355 = vlaneseq
    %v1356 = vshrl.u32 %v1355, 7
    %v1357 = vsub.s32 %v1354, %v1356
    %v1358 = vrot.slane %v1343, %v1357
    %v1359 = vadd.s32 %v1354, 4294967288
    %v1360 = vlaneseq
    %v1361 = vshrl.u32 %v1360, 7
    %v1362 = vsub.s32 %v1359, %v1361
    %v1363 = vrot.slane %v1346, %v1362
    %vm1364 = vcmask 130112
    %v1365 = vsel %vm1364, %v1363, %v1358
    %v1366 = vlaneseq
    %v1367 = vshrl.u32 %v1366, 7
    %v1368 = vsub.s32 %v1354, %v1367
    %v1369 = vrot.slane %v1349, %v1368
    %v1370 = vlaneseq
    %v1371 = vshrl.u32 %v1370, 7
    %v1372 = vsub.s32 %v1359, %v1371
    %v1373 = vrot.slane %v1352, %v1372
    %v1374 = vsel %vm1364, %v1373, %v1369
    %vm1377 = vcmask 122880
    %1378 = vst.msk [vmem:[#allocation10] sm:$0x1] %vm1377, %v1365
    %1379 = vst.msk [vmem:[#allocation10 + $0x1] sm:$0x1] %vm1377, %v1374
    // Predicated region
    $region70: #{cuts_plus_forward.1} parent=1 // pred_check
      _
    $region71: #{cuts_plus_forward.1} parent=1 // pred_check_branch
      %1381 = sbr.rel (0) target = $region73
    $region72: #{cuts_plus_forward.1} parent=1 // pred_region
      %s1383 = ssub.s32 32, 32
      %1384 = vsyncadd [#allocation4], %s1383
      %s1385 = sshll.u32 [#allocation10], 4
      %s1386 = int_to_ptr.vmem [resolvable:$true] %s1385
      %1391 = dma.vmem_to_hbm [thread:$0]  %s1386, 32, %s13, [#allocation4], 16, 16, 1
    $region73: #{cuts_plus_forward.1} parent=1 // pred_fallthru
      _
    // Predicated region
    $region74: #{cuts_plus_forward.1} parent=1 // pred_check
      _
    $region75: #{cuts_plus_forward.1} parent=1 // pred_check_branch
      %1393 = sbr.rel (0) target = $region77
    $region76: #{cuts_plus_forward.1} parent=1 // pred_region
      %1394 = dma.done [#allocation4], 32
    $region77: #{cuts_plus_forward.1} parent=1 // pred_fallthru
      _
    %1395 = vsyncpa [#allocation3], 1
    %1396 = vsyncpa [#allocation6], 1
    %1397 = vsyncpa [#allocation9], 1
    %1398 = vsyncpa [#allocation4], 1

</llo_original>
